<compile_context>
chip_gen: v7x
topology: tpu7x:2x2x1
jax: 0.10.0
libtpu: 0.0.40
codegen_flags: <defaults>
</compile_context>

<pallas_src>
import functools

import jax
import jax.numpy as jnp
from jax import lax
from jax.experimental import pallas as pl
from jax.experimental.pallas import tpu as pltpu


# ----------------------------------------------------------------------------
# In-kernel helpers (slice + concat == unambiguous circular shift; the wrapped
# rows/lanes are never consumed by any valid output position).
# ----------------------------------------------------------------------------
def _shift_rows(v, k):
    return jnp.concatenate([v[k:, :], v[:k, :]], axis=0)


def _shift_lanes(v, k):
    return jnp.concatenate([v[:, k:], v[:, :k]], axis=1)


# ----------------------------------------------------------------------------
# The single fused kernel.
# ----------------------------------------------------------------------------
def _minionn_kernel(x_ref, t1_ref, b1_ref, t2_ref, b2_ref,
                    wf1_ref, bf1_ref, wf2_ref, bf2_ref, out_ref, *, bt):
    f32 = jnp.float32
    x = x_ref[...]                                                 # (bt, 28, 28)

    # ---- conv1 (5x5, 1->16) + bias + ReLU : one matmul vs Toeplitz weight.
    # rows = (b, oh), lanes = ow*16 + cout  (24*16 = 384 lanes).
    a1 = jnp.concatenate([x[:, i:i + 24, :] for i in range(5)], axis=2)
    a1 = a1.reshape(bt * 24, 5 * 28)                               # (bt*24, 140)
    y1 = jnp.dot(a1, t1_ref[...], preferred_element_type=f32)      # (bt*24, 384)
    y1 = jnp.maximum(y1 + b1_ref[...], 0.0)

    # ---- maxpool 2x2 (uncompacted: valid at even rows / even 16-lane groups).
    m1 = jnp.maximum(y1, _shift_rows(y1, 1))
    m1 = jnp.maximum(m1, _shift_lanes(m1, 16))                     # (bt*24, 384)

    # ---- conv2 (5x5, 16->16) + bias + ReLU : one matmul on 5 row slabs.
    m1 = m1.reshape(bt, 24, 384)
    a2 = jnp.concatenate([m1[:, 2 * i:2 * i + 16, :] for i in range(5)],
                         axis=2)                                   # (bt, 16, 1920)
    a2 = a2.reshape(bt * 16, 5 * 384)
    y2 = jnp.dot(a2, t2_ref[...], preferred_element_type=f32)      # (bt*16, 128)
    y2 = jnp.maximum(y2 + b2_ref[...], 0.0)

    # ---- maxpool 2x2 (uncompacted: valid rows 0,4,8,12 of each image).
    m2 = jnp.maximum(y2, _shift_rows(y2, 2))
    m2 = jnp.maximum(m2, _shift_lanes(m2, 16))                     # (bt*16, 128)

    # ---- flatten: collect rows {0,4,8,12} of each image into one 512-lane row
    # (NCHW flatten order + stride-2 width selection live in the fc1 weight).
    flat = jnp.concatenate(
        [m2, _shift_rows(m2, 4), _shift_rows(m2, 8), _shift_rows(m2, 12)],
        axis=1)                                                    # (bt*16, 512)

    # ---- classifier (only row 16*b of each image holds the real result).
    h = jnp.dot(flat, wf1_ref[...], preferred_element_type=f32) + bf1_ref[...]
    h = jnp.maximum(h, 0.0)                                        # (bt*16, 100)
    o = jnp.dot(h, wf2_ref[...], preferred_element_type=f32) + bf2_ref[...]
    out_ref[...] = o.reshape(bt, 16, 10)


# ----------------------------------------------------------------------------
# Wrapper-side weight packing (tiny, runs once per call in XLA).
# ----------------------------------------------------------------------------
def _pack_params(p):
    f32 = jnp.float32

    # conv1 -> Toeplitz T1 (140, 384): T1[i*28+w, ow*16+co] = W1[co,0,i,w-ow].
    w1 = p["conv1_w"].astype(f32)                       # (16, 1, 5, 5) OIHW
    w1k = jnp.transpose(w1[:, 0], (1, 2, 0))            # (i, j, co)
    d = jnp.arange(28)[:, None] - jnp.arange(24)[None, :]
    t1 = jnp.where(((d >= 0) & (d < 5))[None, :, :, None],
                   w1k[:, jnp.clip(d, 0, 4), :], 0.0)   # (5, 28, 24, 16)
    t1 = t1.reshape(140, 384)
    b1 = jnp.tile(p["conv1_b"].astype(f32), 24).reshape(1, 384)

    # conv2 -> Toeplitz T2 (1920, 128) over the *uncompacted* pool1 lanes:
    # T2[i*384 + g*16 + ci, ow*16 + co] = W2[co,ci,i,g//2-ow] if g even & valid.
    w2 = p["conv2_w"].astype(f32)                       # (16, 16, 5, 5) OIHW
    w2k = jnp.transpose(w2, (2, 3, 1, 0))               # (i, j, ci, co)
    g = jnp.arange(24)[:, None]
    ow = jnp.arange(8)[None, :]
    dj = g // 2 - ow
    ok = (dj >= 0) & (dj < 5) & (g % 2 == 0)
    t2 = jnp.where(ok[None, :, :, None, None],
                   w2k[:, jnp.clip(dj, 0, 4), :, :], 0.0)   # (5, 24, 8, 16, 16)
    t2 = jnp.transpose(t2, (0, 1, 3, 2, 4)).reshape(1920, 128)
    b2 = jnp.tile(p["conv2_b"].astype(f32), 8).reshape(1, 128)

    # fc1 -> (512, 100) over the (q, uncompacted-w, c) lane layout, absorbing
    # both the stride-2 width selection and the PyTorch NCHW flatten order.
    wf1 = p["fc1_w"].astype(f32).reshape(100, 16, 4, 4)         # (o, c, q, w)
    wf1 = jnp.transpose(wf1, (2, 3, 1, 0))                      # (q, w, c, o)
    wf1 = jnp.zeros((4, 4, 2, 16, 100), f32).at[:, :, 0].set(wf1)
    wf1 = wf1.reshape(512, 100)
    bf1 = p["fc1_b"].astype(f32).reshape(1, 100)

    wf2 = p["fc2_w"].astype(f32).T                              # (100, 10)
    bf2 = p["fc2_b"].astype(f32).reshape(1, 10)
    return t1, b1, t2, b2, wf1, bf1, wf2, bf2


# ----------------------------------------------------------------------------
# Full forward pass.
# ----------------------------------------------------------------------------
def minionn_forward(x_nchw, params, *, batch_tile=None):
    N = x_nchw.shape[0]
    x = x_nchw[:, 0, :, :].astype(jnp.float32)          # (N, 28, 28)

    # Batch tile: bounded (VMEM-safe on v7x) and >=2 grid blocks when N >= 2
    # so both v7x TensorCores get work via the "parallel" grid axis.
    bt = batch_tile if batch_tile is not None else max(1, min(16, pl.cdiv(N, 2)))
    grid = pl.cdiv(N, bt)
    n_pad = grid * bt
    if n_pad != N:
        x = jnp.pad(x, ((0, n_pad - N), (0, 0), (0, 0)))

    t1, b1, t2, b2, wf1, bf1, wf2, bf2 = _pack_params(params)

    out = pl.pallas_call(
        functools.partial(_minionn_kernel, bt=bt),
        out_shape=jax.ShapeDtypeStruct((n_pad, 16, 10), jnp.float32),
        grid=(grid,),
        in_specs=[
            pl.BlockSpec((bt, 28, 28), lambda i: (i, 0, 0)),
            pl.BlockSpec((140, 384), lambda i: (0, 0)),
            pl.BlockSpec((1, 384), lambda i: (0, 0)),
            pl.BlockSpec((1920, 128), lambda i: (0, 0)),
            pl.BlockSpec((1, 128), lambda i: (0, 0)),
            pl.BlockSpec((512, 100), lambda i: (0, 0)),
            pl.BlockSpec((1, 100), lambda i: (0, 0)),
            pl.BlockSpec((100, 10), lambda i: (0, 0)),
            pl.BlockSpec((1, 10), lambda i: (0, 0)),
        ],
        out_specs=pl.BlockSpec((bt, 16, 10), lambda i: (i, 0, 0)),
        compiler_params=pltpu.CompilerParams(
            dimension_semantics=("parallel",),
            vmem_limit_bytes=32 * 1024 * 1024),
    )(x, t1, b1, t2, b2, wf1, bf1, wf2, bf2)

    # Valid result of image b lives at row 0 of its 16-row (uncompacted) block.
    return out[:N, 0, :]


# ----------------------------------------------------------------------------
# Pure-JAX reference (numerical cross-check of the fused kernel).
# ----------------------------------------------------------------------------
def reference_forward(x, p):
    dn = ("NCHW", "OIHW", "NCHW")
    y = lax.conv_general_dilated(x, p["conv1_w"], (1, 1), "VALID",
                                 dimension_numbers=dn)
    y = jnp.maximum(y + p["conv1_b"][None, :, None, None], 0.0)
    y = lax.reduce_window(y, -jnp.inf, lax.max, (1, 1, 2, 2), (1, 1, 2, 2), "VALID")
    y = lax.conv_general_dilated(y, p["conv2_w"], (1, 1), "VALID",
                                 dimension_numbers=dn)
    y = jnp.maximum(y + p["conv2_b"][None, :, None, None], 0.0)
    y = lax.reduce_window(y, -jnp.inf, lax.max, (1, 1, 2, 2), (1, 1, 2, 2), "VALID")
    y = y.reshape(y.shape[0], -1)
    y = jnp.maximum(y @ p["fc1_w"].T + p["fc1_b"], 0.0)
    return y @ p["fc2_w"].T + p["fc2_b"]


# ----------------------------------------------------------------------------
if __name__ == "__main__":
    key = jax.random.PRNGKey(0)
    ks = jax.random.split(key, 9)

    # Linear(256, ...) implies 28x28 single-channel inputs (16*4*4 = 256).
    x = jax.random.normal(ks[0], (2, 1, 28, 28), dtype=jnp.float32)

    params = {
        "conv1_w": 0.20 * jax.random.normal(ks[1], (16, 1, 5, 5), jnp.float32),
        "conv1_b": 0.10 * jax.random.normal(ks[2], (16,), jnp.float32),
        "conv2_w": 0.05 * jax.random.normal(ks[3], (16, 16, 5, 5), jnp.float32),
        "conv2_b": 0.10 * jax.random.normal(ks[4], (16,), jnp.float32),
        "fc1_w": 0.0625 * jax.random.normal(ks[5], (100, 256), jnp.float32),
        "fc1_b": 0.10 * jax.random.normal(ks[6], (100,), jnp.float32),
        "fc2_w": 0.10 * jax.random.normal(ks[7], (10, 100), jnp.float32),
        "fc2_b": 0.10 * jax.random.normal(ks[8], (10,), jnp.float32),
    }

    out = jax.jit(minionn_forward)(x, params)
    out = jax.block_until_ready(out)
    assert out.shape == (2, 10) and out.dtype == jnp.float32

    ref = jax.block_until_ready(reference_forward(x, params))
    if not jnp.allclose(out, ref, rtol=2e-2, atol=2e-2):
        raise AssertionError("Pallas output does not match reference")

    print("KERNEL_OK")
</pallas_src>

<mosaic_0001>
module attributes {stable_mosaic.version = 11 : i64} {
  func.func @_minionn_kernel(%arg0: i32, %arg1: memref<1x28x28xf32, #tpu.memory_space<vmem>>, %arg2: memref<140x384xf32, #tpu.memory_space<vmem>>, %arg3: memref<1x384xf32, #tpu.memory_space<vmem>>, %arg4: memref<1920x128xf32, #tpu.memory_space<vmem>>, %arg5: memref<1x128xf32, #tpu.memory_space<vmem>>, %arg6: memref<512x100xf32, #tpu.memory_space<vmem>>, %arg7: memref<1x100xf32, #tpu.memory_space<vmem>>, %arg8: memref<100x10xf32, #tpu.memory_space<vmem>>, %arg9: memref<1x10xf32, #tpu.memory_space<vmem>>, %arg10: memref<1x16x10xf32, #tpu.memory_space<vmem>>) attributes {dimension_semantics = [#tpu.dimension_semantics<parallel>], iteration_bounds = array<i64: 2>, scalar_prefetch = 0 : i64, scratch_operands = 0 : i64, tpu.core_type = #tpu.core_type<tc>, window_params = [{transform_indices = @transform_0, window_bounds = array<i64: 1, 28, 28>}, {pipeline_mode = #tpu.pipeline_mode<synchronous>, transform_indices = @transform_1, window_bounds = array<i64: 140, 384>}, {pipeline_mode = #tpu.pipeline_mode<synchronous>, transform_indices = @transform_2, window_bounds = array<i64: 1, 384>}, {pipeline_mode = #tpu.pipeline_mode<synchronous>, transform_indices = @transform_3, window_bounds = array<i64: 1920, 128>}, {pipeline_mode = #tpu.pipeline_mode<synchronous>, transform_indices = @transform_4, window_bounds = array<i64: 1, 128>}, {pipeline_mode = #tpu.pipeline_mode<synchronous>, transform_indices = @transform_5, window_bounds = array<i64: 512, 100>}, {pipeline_mode = #tpu.pipeline_mode<synchronous>, transform_indices = @transform_6, window_bounds = array<i64: 1, 100>}, {pipeline_mode = #tpu.pipeline_mode<synchronous>, transform_indices = @transform_7, window_bounds = array<i64: 100, 10>}, {pipeline_mode = #tpu.pipeline_mode<synchronous>, transform_indices = @transform_8, window_bounds = array<i64: 1, 10>}, {transform_indices = @transform_9, window_bounds = array<i64: 1, 16, 10>}]} {
    %c0 = arith.constant 0 : index
    %c0_0 = arith.constant 0 : index
    %c0_1 = arith.constant 0 : index
    %0 = vector.load %arg1[%c0, %c0_0, %c0_1] : memref<1x28x28xf32, #tpu.memory_space<vmem>>, vector<1x28x28xf32>
    %1 = vector.extract_strided_slice %0 {offsets = [0, 0, 0], sizes = [1, 24, 28], strides = [1, 1, 1]} : vector<1x28x28xf32> to vector<1x24x28xf32>
    %2 = vector.extract_strided_slice %0 {offsets = [0, 1, 0], sizes = [1, 24, 28], strides = [1, 1, 1]} : vector<1x28x28xf32> to vector<1x24x28xf32>
    %3 = vector.extract_strided_slice %0 {offsets = [0, 2, 0], sizes = [1, 24, 28], strides = [1, 1, 1]} : vector<1x28x28xf32> to vector<1x24x28xf32>
    %4 = vector.extract_strided_slice %0 {offsets = [0, 3, 0], sizes = [1, 24, 28], strides = [1, 1, 1]} : vector<1x28x28xf32> to vector<1x24x28xf32>
    %5 = vector.extract_strided_slice %0 {offsets = [0, 4, 0], sizes = [1, 24, 28], strides = [1, 1, 1]} : vector<1x28x28xf32> to vector<1x24x28xf32>
    %6 = tpu.concatenate %1, %2, %3, %4, %5 in 2 : vector<1x24x28xf32>, vector<1x24x28xf32>, vector<1x24x28xf32>, vector<1x24x28xf32>, vector<1x24x28xf32> -> vector<1x24x140xf32>
    %7 = vector.shape_cast %6 : vector<1x24x140xf32> to vector<24x140xf32>
    %c0_2 = arith.constant 0 : index
    %c0_3 = arith.constant 0 : index
    %8 = vector.load %arg2[%c0_2, %c0_3] : memref<140x384xf32, #tpu.memory_space<vmem>>, vector<140x384xf32>
    %cst = arith.constant dense<0.000000e+00> : vector<24x384xf32>
    %9 = tpu.matmul %7, %8, %cst {dimension_numbers = #tpu.dot_dimension_numbers<[1], [0], [0], [1], [0, 0, 1, 1], [], []>} : vector<24x140xf32>, vector<140x384xf32>, vector<24x384xf32> -> vector<24x384xf32>
    %c0_4 = arith.constant 0 : index
    %c0_5 = arith.constant 0 : index
    %10 = vector.load %arg3[%c0_4, %c0_5] : memref<1x384xf32, #tpu.memory_space<vmem>>, vector<1x384xf32>
    %11 = vector.broadcast %10 : vector<1x384xf32> to vector<24x384xf32>
    %12 = arith.addf %9, %11 : vector<24x384xf32>
    %cst_6 = arith.constant 0.000000e+00 : f32
    %13 = vector.broadcast %cst_6 : f32 to vector<24x384xf32>
    %14 = arith.maximumf %12, %13 : vector<24x384xf32>
    %15 = vector.extract_strided_slice %14 {offsets = [1, 0], sizes = [23, 384], strides = [1, 1]} : vector<24x384xf32> to vector<23x384xf32>
    %16 = vector.extract_strided_slice %14 {offsets = [0, 0], sizes = [1, 384], strides = [1, 1]} : vector<24x384xf32> to vector<1x384xf32>
    %17 = tpu.concatenate %15, %16 in 0 : vector<23x384xf32>, vector<1x384xf32> -> vector<24x384xf32>
    %18 = arith.maximumf %14, %17 : vector<24x384xf32>
    %19 = vector.extract_strided_slice %18 {offsets = [0, 16], sizes = [24, 368], strides = [1, 1]} : vector<24x384xf32> to vector<24x368xf32>
    %20 = vector.extract_strided_slice %18 {offsets = [0, 0], sizes = [24, 16], strides = [1, 1]} : vector<24x384xf32> to vector<24x16xf32>
    %21 = tpu.concatenate %19, %20 in 1 : vector<24x368xf32>, vector<24x16xf32> -> vector<24x384xf32>
    %22 = arith.maximumf %18, %21 : vector<24x384xf32>
    %23 = vector.shape_cast %22 : vector<24x384xf32> to vector<1x24x384xf32>
    %24 = vector.extract_strided_slice %23 {offsets = [0, 0, 0], sizes = [1, 16, 384], strides = [1, 1, 1]} : vector<1x24x384xf32> to vector<1x16x384xf32>
    %25 = vector.extract_strided_slice %23 {offsets = [0, 2, 0], sizes = [1, 16, 384], strides = [1, 1, 1]} : vector<1x24x384xf32> to vector<1x16x384xf32>
    %26 = vector.extract_strided_slice %23 {offsets = [0, 4, 0], sizes = [1, 16, 384], strides = [1, 1, 1]} : vector<1x24x384xf32> to vector<1x16x384xf32>
    %27 = vector.extract_strided_slice %23 {offsets = [0, 6, 0], sizes = [1, 16, 384], strides = [1, 1, 1]} : vector<1x24x384xf32> to vector<1x16x384xf32>
    %28 = vector.extract_strided_slice %23 {offsets = [0, 8, 0], sizes = [1, 16, 384], strides = [1, 1, 1]} : vector<1x24x384xf32> to vector<1x16x384xf32>
    %29 = tpu.concatenate %24, %25, %26, %27, %28 in 2 : vector<1x16x384xf32>, vector<1x16x384xf32>, vector<1x16x384xf32>, vector<1x16x384xf32>, vector<1x16x384xf32> -> vector<1x16x1920xf32>
    %30 = vector.shape_cast %29 : vector<1x16x1920xf32> to vector<16x1920xf32>
    %c0_7 = arith.constant 0 : index
    %c0_8 = arith.constant 0 : index
    %31 = vector.load %arg4[%c0_7, %c0_8] : memref<1920x128xf32, #tpu.memory_space<vmem>>, vector<1920x128xf32>
    %cst_9 = arith.constant dense<0.000000e+00> : vector<16x128xf32>
    %32 = tpu.matmul %30, %31, %cst_9 {dimension_numbers = #tpu.dot_dimension_numbers<[1], [0], [0], [1], [0, 0, 1, 1], [], []>} : vector<16x1920xf32>, vector<1920x128xf32>, vector<16x128xf32> -> vector<16x128xf32>
    %c0_10 = arith.constant 0 : index
    %c0_11 = arith.constant 0 : index
    %33 = vector.load %arg5[%c0_10, %c0_11] : memref<1x128xf32, #tpu.memory_space<vmem>>, vector<1x128xf32>
    %34 = vector.broadcast %33 : vector<1x128xf32> to vector<16x128xf32>
    %35 = arith.addf %32, %34 : vector<16x128xf32>
    %cst_12 = arith.constant 0.000000e+00 : f32
    %36 = vector.broadcast %cst_12 : f32 to vector<16x128xf32>
    %37 = arith.maximumf %35, %36 : vector<16x128xf32>
    %38 = vector.extract_strided_slice %37 {offsets = [2, 0], sizes = [14, 128], strides = [1, 1]} : vector<16x128xf32> to vector<14x128xf32>
    %39 = vector.extract_strided_slice %37 {offsets = [0, 0], sizes = [2, 128], strides = [1, 1]} : vector<16x128xf32> to vector<2x128xf32>
    %40 = tpu.concatenate %38, %39 in 0 : vector<14x128xf32>, vector<2x128xf32> -> vector<16x128xf32>
    %41 = arith.maximumf %37, %40 : vector<16x128xf32>
    %42 = vector.extract_strided_slice %41 {offsets = [0, 16], sizes = [16, 112], strides = [1, 1]} : vector<16x128xf32> to vector<16x112xf32>
    %43 = vector.extract_strided_slice %41 {offsets = [0, 0], sizes = [16, 16], strides = [1, 1]} : vector<16x128xf32> to vector<16x16xf32>
    %44 = tpu.concatenate %42, %43 in 1 : vector<16x112xf32>, vector<16x16xf32> -> vector<16x128xf32>
    %45 = arith.maximumf %41, %44 : vector<16x128xf32>
    %46 = vector.extract_strided_slice %45 {offsets = [4, 0], sizes = [12, 128], strides = [1, 1]} : vector<16x128xf32> to vector<12x128xf32>
    %47 = vector.extract_strided_slice %45 {offsets = [0, 0], sizes = [4, 128], strides = [1, 1]} : vector<16x128xf32> to vector<4x128xf32>
    %48 = tpu.concatenate %46, %47 in 0 : vector<12x128xf32>, vector<4x128xf32> -> vector<16x128xf32>
    %49 = vector.extract_strided_slice %45 {offsets = [8, 0], sizes = [8, 128], strides = [1, 1]} : vector<16x128xf32> to vector<8x128xf32>
    %50 = vector.extract_strided_slice %45 {offsets = [0, 0], sizes = [8, 128], strides = [1, 1]} : vector<16x128xf32> to vector<8x128xf32>
    %51 = tpu.concatenate %49, %50 in 0 : vector<8x128xf32>, vector<8x128xf32> -> vector<16x128xf32>
    %52 = vector.extract_strided_slice %45 {offsets = [12, 0], sizes = [4, 128], strides = [1, 1]} : vector<16x128xf32> to vector<4x128xf32>
    %53 = vector.extract_strided_slice %45 {offsets = [0, 0], sizes = [12, 128], strides = [1, 1]} : vector<16x128xf32> to vector<12x128xf32>
    %54 = tpu.concatenate %52, %53 in 0 : vector<4x128xf32>, vector<12x128xf32> -> vector<16x128xf32>
    %55 = tpu.concatenate %45, %48, %51, %54 in 1 : vector<16x128xf32>, vector<16x128xf32>, vector<16x128xf32>, vector<16x128xf32> -> vector<16x512xf32>
    %c0_13 = arith.constant 0 : index
    %c0_14 = arith.constant 0 : index
    %56 = vector.load %arg6[%c0_13, %c0_14] : memref<512x100xf32, #tpu.memory_space<vmem>>, vector<512x100xf32>
    %cst_15 = arith.constant dense<0.000000e+00> : vector<16x100xf32>
    %57 = tpu.matmul %55, %56, %cst_15 {dimension_numbers = #tpu.dot_dimension_numbers<[1], [0], [0], [1], [0, 0, 1, 1], [], []>} : vector<16x512xf32>, vector<512x100xf32>, vector<16x100xf32> -> vector<16x100xf32>
    %c0_16 = arith.constant 0 : index
    %c0_17 = arith.constant 0 : index
    %58 = vector.load %arg7[%c0_16, %c0_17] : memref<1x100xf32, #tpu.memory_space<vmem>>, vector<1x100xf32>
    %59 = vector.broadcast %58 : vector<1x100xf32> to vector<16x100xf32>
    %60 = arith.addf %57, %59 : vector<16x100xf32>
    %cst_18 = arith.constant 0.000000e+00 : f32
    %61 = vector.broadcast %cst_18 : f32 to vector<16x100xf32>
    %62 = arith.maximumf %60, %61 : vector<16x100xf32>
    %c0_19 = arith.constant 0 : index
    %c0_20 = arith.constant 0 : index
    %63 = vector.load %arg8[%c0_19, %c0_20] : memref<100x10xf32, #tpu.memory_space<vmem>>, vector<100x10xf32>
    %cst_21 = arith.constant dense<0.000000e+00> : vector<16x10xf32>
    %64 = tpu.matmul %62, %63, %cst_21 {dimension_numbers = #tpu.dot_dimension_numbers<[1], [0], [0], [1], [0, 0, 1, 1], [], []>} : vector<16x100xf32>, vector<100x10xf32>, vector<16x10xf32> -> vector<16x10xf32>
    %c0_22 = arith.constant 0 : index
    %c0_23 = arith.constant 0 : index
    %65 = vector.load %arg9[%c0_22, %c0_23] : memref<1x10xf32, #tpu.memory_space<vmem>>, vector<1x10xf32>
    %66 = vector.broadcast %65 : vector<1x10xf32> to vector<16x10xf32>
    %67 = arith.addf %64, %66 : vector<16x10xf32>
    %68 = vector.shape_cast %67 : vector<16x10xf32> to vector<1x16x10xf32>
    %c0_24 = arith.constant 0 : index
    %c0_25 = arith.constant 0 : index
    %c0_26 = arith.constant 0 : index
    %69 = vector.load %arg10[%c0_24, %c0_25, %c0_26] : memref<1x16x10xf32, #tpu.memory_space<vmem>>, vector<1x16x10xf32>
    tpu.vector_store %arg10[%c0_24, %c0_25, %c0_26], %68 {strides = array<i32>} : memref<1x16x10xf32, #tpu.memory_space<vmem>>, vector<1x16x10xf32>,
    return
  }
  func.func @transform_0(%arg0: i32) -> (i32, i32, i32) {
    %c0_i32 = arith.constant 0 : i32
    %c0_i32_0 = arith.constant 0 : i32
    %c0_i32_1 = arith.constant 0 : i32
    return %arg0, %c0_i32, %c0_i32_0 : i32, i32, i32
  }
  func.func @transform_1(%arg0: i32) -> (i32, i32) {
    %c0_i32 = arith.constant 0 : i32
    %c0_i32_0 = arith.constant 0 : i32
    %c0_i32_1 = arith.constant 0 : i32
    return %c0_i32, %c0_i32_0 : i32, i32
  }
  func.func @transform_2(%arg0: i32) -> (i32, i32) {
    %c0_i32 = arith.constant 0 : i32
    %c0_i32_0 = arith.constant 0 : i32
    %c0_i32_1 = arith.constant 0 : i32
    return %c0_i32, %c0_i32_0 : i32, i32
  }
  func.func @transform_3(%arg0: i32) -> (i32, i32) {
    %c0_i32 = arith.constant 0 : i32
    %c0_i32_0 = arith.constant 0 : i32
    %c0_i32_1 = arith.constant 0 : i32
    return %c0_i32, %c0_i32_0 : i32, i32
  }
  func.func @transform_4(%arg0: i32) -> (i32, i32) {
    %c0_i32 = arith.constant 0 : i32
    %c0_i32_0 = arith.constant 0 : i32
    %c0_i32_1 = arith.constant 0 : i32
    return %c0_i32, %c0_i32_0 : i32, i32
  }
  func.func @transform_5(%arg0: i32) -> (i32, i32) {
    %c0_i32 = arith.constant 0 : i32
    %c0_i32_0 = arith.constant 0 : i32
    %c0_i32_1 = arith.constant 0 : i32
    return %c0_i32, %c0_i32_0 : i32, i32
  }
  func.func @transform_6(%arg0: i32) -> (i32, i32) {
    %c0_i32 = arith.constant 0 : i32
    %c0_i32_0 = arith.constant 0 : i32
    %c0_i32_1 = arith.constant 0 : i32
    return %c0_i32, %c0_i32_0 : i32, i32
  }
  func.func @transform_7(%arg0: i32) -> (i32, i32) {
    %c0_i32 = arith.constant 0 : i32
    %c0_i32_0 = arith.constant 0 : i32
    %c0_i32_1 = arith.constant 0 : i32
    return %c0_i32, %c0_i32_0 : i32, i32
  }
  func.func @transform_8(%arg0: i32) -> (i32, i32) {
    %c0_i32 = arith.constant 0 : i32
    %c0_i32_0 = arith.constant 0 : i32
    %c0_i32_1 = arith.constant 0 : i32
    return %c0_i32, %c0_i32_0 : i32, i32
  }
  func.func @transform_9(%arg0: i32) -> (i32, i32, i32) {
    %c0_i32 = arith.constant 0 : i32
    %c0_i32_0 = arith.constant 0 : i32
    %c0_i32_1 = arith.constant 0 : i32
    return %arg0, %c0_i32, %c0_i32_0 : i32, i32, i32
  }
}

</mosaic_0001>

<llo_original>
// kernel: tile.13
$region0: #{tile.13}
  #allocation0 [shape = 's32[1]{0}', space=sflag, size = 0x4, scoped, tag = 'scoped memory for tile.13']
  %s0 = inlined_call_operand.vmem [shape: f32[16], index: 0, kind: input, shape index: {}]
  %s1 = inlined_call_operand.vmem [shape: f32[24,16], index: 1, kind: output, shape index: {}]
  // Predicated region
  $region2: #{tile.13} parent=0 // pred_check
    _
  $region3: #{tile.13} parent=0 // pred_check_branch
    %3 = sbr.rel (0) target = $region5
  $region4: #{tile.13} parent=0 // pred_region
    _
  $region5: #{tile.13} parent=0 // pred_fallthru
    _
  %v4 = vld [vmem:[%s0] ss:$0 sm:$0xff]
  %5 = vst [vmem:[%s1] sm:$0xff] %v4
  %s6 = scalar_lea.vmem %s1, 8
  %7 = vst [vmem:[%s6] sm:$0xff] %v4
  %s8 = scalar_lea.vmem %s1, 16
  %9 = vst [vmem:[%s8] sm:$0xff] %v4

// kernel: tile.14
$region0: #{tile.14}
  %s0 = inlined_call_operand.vmem [shape: f32[24,16], index: 0, kind: input, shape index: {}]
  %s1 = inlined_call_operand.vmem [shape: f32[1,384], index: 1, kind: output, shape index: {}]
  $region1: #{tile.14} parent=0
    #allocation0 [shape = 'u8[12288]{0}', space=vmem, size = 0x3000, scoped, tag = 'scoped mem for output reshape']
    %v2 = vld [vmem:[%s0] ss:$8 sm:$0x7]
    %vm3 = vcmask 130048
    %4 = vst.msk [vmem:[#allocation0] ss:$8 sm:$0x7] %vm3, %v2
    %s5 = scalar_lea.vmem %s0, 7
    %v6 = vld [vmem:[%s5] ss:$8 sm:$0x7]
    %7 = vrot.lane.b32.xlu0 %v6, 112
    %v8 = vpop.permute.xlu0 %7
    %vm9 = vcmask 1048448
    %10 = vst.msk [vmem:[#allocation0] ss:$8 sm:$0x7] %vm9, %v8
    %s11 = scalar_lea.vmem %s0, 6
    %v12 = vld [vmem:[%s11] ss:$8 sm:$0x7]
    %13 = vrot.lane.b32.xlu0 %v12, 96
    %v14 = vpop.permute.xlu0 %13
    %vm15 = vcmask 917248
    %16 = vst.msk [vmem:[#allocation0] ss:$8 sm:$0x7] %vm15, %v14
    %s17 = scalar_lea.vmem %s0, 5
    %v18 = vld [vmem:[%s17] ss:$8 sm:$0x7]
    %19 = vrot.lane.b32.xlu0 %v18, 80
    %v20 = vpop.permute.xlu0 %19
    %vm21 = vcmask 786048
    %22 = vst.msk [vmem:[#allocation0] ss:$8 sm:$0x7] %vm21, %v20
    %s23 = scalar_lea.vmem %s0, 4
    %v24 = vld [vmem:[%s23] ss:$8 sm:$0x7]
    %25 = vrot.lane.b32.xlu0 %v24, 64
    %v26 = vpop.permute.xlu0 %25
    %vm27 = vcmask 654848
    %28 = vst.msk [vmem:[#allocation0] ss:$8 sm:$0x7] %vm27, %v26
    %s29 = scalar_lea.vmem %s0, 3
    %v30 = vld [vmem:[%s29] ss:$8 sm:$0x7]
    %31 = vrot.lane.b32.xlu0 %v30, 48
    %v32 = vpop.permute.xlu0 %31
    %vm33 = vcmask 523648
    %34 = vst.msk [vmem:[#allocation0] ss:$8 sm:$0x7] %vm33, %v32
    %s35 = scalar_lea.vmem %s0, 2
    %v36 = vld [vmem:[%s35] ss:$8 sm:$0x7]
    %37 = vrot.lane.b32.xlu0 %v36, 32
    %v38 = vpop.permute.xlu0 %37
    %vm39 = vcmask 392448
    %40 = vst.msk [vmem:[#allocation0] ss:$8 sm:$0x7] %vm39, %v38
    %s41 = scalar_lea.vmem %s0, 1
    %v42 = vld [vmem:[%s41] ss:$8 sm:$0x7]
    %43 = vrot.lane.b32.xlu0 %v42, 16
    %v44 = vpop.permute.xlu0 %43
    %vm45 = vcmask 261248
    %46 = vst.msk [vmem:[#allocation0] ss:$8 sm:$0x7] %vm45, %v44
    %s48 = sshllo.u32 0, 1
    %v50 = vld [vmem:[#allocation0] sm:%s48]
    %s51 = sshllo.u32 0, 1
    %52 = vst [vmem:[%s1] sm:%s51] %v50
    %s53 = scalar_lea.vmem [#allocation0], 8
    %v54 = vld [vmem:[%s53] sm:%s48]
    %s55 = sshllo.u32 0, 1
    %s56 = scalar_lea.vmem %s1, 1
    %57 = vst [vmem:[%s56] sm:%s55] %v54
    %s58 = scalar_lea.vmem [#allocation0], 16
    %v59 = vld [vmem:[%s58] sm:%s48]
    %s60 = sshllo.u32 0, 1
    %s61 = smul.addr 1, 2
    %s62 = scalar_lea.vmem %s1, %s61
    %63 = vst [vmem:[%s62] sm:%s60] %v59

// kernel: tile.18
$region0: #{tile.18}
  #allocation0 [shape = 's32[1]{0}', space=sflag, size = 0x4, scoped, tag = 'scoped memory for tile.18']
  %s0 = inlined_call_operand.vmem [shape: f32[16], index: 0, kind: input, shape index: {}]
  %s1 = inlined_call_operand.vmem [shape: f32[8,16], index: 1, kind: output, shape index: {}]
  // Predicated region
  $region2: #{tile.18} parent=0 // pred_check
    _
  $region3: #{tile.18} parent=0 // pred_check_branch
    %3 = sbr.rel (0) target = $region5
  $region4: #{tile.18} parent=0 // pred_region
    _
  $region5: #{tile.18} parent=0 // pred_fallthru
    _
  %v4 = vld [vmem:[%s0] ss:$0 sm:$0xff]
  %5 = vst [vmem:[%s1] sm:$0xff] %v4

// kernel: tile.19
$region0: #{tile.19}
  %s0 = inlined_call_operand.vmem [shape: f32[8,16], index: 0, kind: input, shape index: {}]
  %s1 = inlined_call_operand.vmem [shape: f32[1,128], index: 1, kind: output, shape index: {}]
  $region1: #{tile.19} parent=0
    #allocation0 [shape = 'u8[4096]{0}', space=vmem, size = 0x1000, scoped, tag = 'scoped mem for output reshape']
    %v2 = vld [vmem:[%s0] sm:$0x1]
    %vm3 = vcmask 130048
    %4 = vst.msk [vmem:[#allocation0] sm:$0x1] %vm3, %v2
    %s5 = scalar_lea.vmem %s0, 7
    %v6 = vld [vmem:[%s5] sm:$0x1]
    %7 = vrot.lane.b32.xlu0 %v6, 112
    %v8 = vpop.permute.xlu0 %7
    %vm9 = vcmask 1048448
    %10 = vst.msk [vmem:[#allocation0] sm:$0x1] %vm9, %v8
    %s11 = scalar_lea.vmem %s0, 6
    %v12 = vld [vmem:[%s11] sm:$0x1]
    %13 = vrot.lane.b32.xlu0 %v12, 96
    %v14 = vpop.permute.xlu0 %13
    %vm15 = vcmask 917248
    %16 = vst.msk [vmem:[#allocation0] sm:$0x1] %vm15, %v14
    %s17 = scalar_lea.vmem %s0, 5
    %v18 = vld [vmem:[%s17] sm:$0x1]
    %19 = vrot.lane.b32.xlu0 %v18, 80
    %v20 = vpop.permute.xlu0 %19
    %vm21 = vcmask 786048
    %22 = vst.msk [vmem:[#allocation0] sm:$0x1] %vm21, %v20
    %s23 = scalar_lea.vmem %s0, 4
    %v24 = vld [vmem:[%s23] sm:$0x1]
    %25 = vrot.lane.b32.xlu0 %v24, 64
    %v26 = vpop.permute.xlu0 %25
    %vm27 = vcmask 654848
    %28 = vst.msk [vmem:[#allocation0] sm:$0x1] %vm27, %v26
    %s29 = scalar_lea.vmem %s0, 3
    %v30 = vld [vmem:[%s29] sm:$0x1]
    %31 = vrot.lane.b32.xlu0 %v30, 48
    %v32 = vpop.permute.xlu0 %31
    %vm33 = vcmask 523648
    %34 = vst.msk [vmem:[#allocation0] sm:$0x1] %vm33, %v32
    %s35 = scalar_lea.vmem %s0, 2
    %v36 = vld [vmem:[%s35] sm:$0x1]
    %37 = vrot.lane.b32.xlu0 %v36, 32
    %v38 = vpop.permute.xlu0 %37
    %vm39 = vcmask 392448
    %40 = vst.msk [vmem:[#allocation0] sm:$0x1] %vm39, %v38
    %s41 = scalar_lea.vmem %s0, 1
    %v42 = vld [vmem:[%s41] sm:$0x1]
    %43 = vrot.lane.b32.xlu0 %v42, 16
    %v44 = vpop.permute.xlu0 %43
    %vm45 = vcmask 261248
    %46 = vst.msk [vmem:[#allocation0] sm:$0x1] %vm45, %v44
    %s48 = sshllo.u32 0, 1
    %v50 = vld [vmem:[#allocation0] sm:%s48]
    %s51 = sshllo.u32 0, 1
    %52 = vst [vmem:[%s1] sm:%s51] %v50

// kernel: minionn_forward.1
$region0: #{minionn_forward.1}
  #allocation0 [shape = 'u32[]', space=smem, size = 0x4, offset = 0x4, fixed_abs, tag = 'smem constant byte address 0x4 - core index']
  #allocation1 [shape = 'u32[144,128]{1,0:T(1,128)}', space=vmem, size = 0x12000, scoped, tag = 'internal scratch']
  %s0 = inlined_call_operand.vmem [shape: f32[2,28,28], index: 0, kind: input, shape index: {}]
  %s1 = inlined_call_operand.vmem [shape: f32[140,384], index: 1, kind: input, shape index: {}]
  %s2 = inlined_call_operand.vmem [shape: f32[1,384], index: 2, kind: input, shape index: {}]
  %s3 = inlined_call_operand.vmem [shape: f32[1920,128], index: 3, kind: input, shape index: {}]
  %s4 = inlined_call_operand.vmem [shape: f32[1,128], index: 4, kind: input, shape index: {}]
  %s5 = inlined_call_operand.vmem [shape: f32[512,100], index: 5, kind: input, shape index: {}]
  %s6 = inlined_call_operand.vmem [shape: f32[1,100], index: 6, kind: input, shape index: {}]
  %s7 = inlined_call_operand.vmem [shape: f32[100,10], index: 7, kind: input, shape index: {}]
  %s8 = inlined_call_operand.vmem [shape: f32[1,10], index: 8, kind: input, shape index: {}]
  %s9 = inlined_call_operand.vmem [shape: f32[2,16,10], index: 9, kind: output, shape index: {}]
  %s10 = sld [smem:[#allocation0]]
  $region69: #{minionn_forward.1} parent=0
    _
  %s12 = ssub.s32 1, %s10
  %s13 = scalar_select 0, %s12, %s10
  loop: start=0, step=1, limit=4
  $region2: #{minionn_forward.1} parent=0 // loop_pre_header
    _
  $region3: #{minionn_forward.1} parent=0 // loop_header
    %s15 = sphi 0, %s19
    %p16 = scmp.ge.s32.totalorder %s15, 4
    %s25 = sphi 0, %s27
    %s28 = sphi 0, %s25
    %s29 = sphi 0, %s28
    %s45 = sphi 0, %s29
    %s49 = sphi 0, %s49
    %s51 = sphi 0, %s49
    %s52 = sphi 0, %s51
    %s66 = sphi 0, %s52
    %s70 = sphi 0, %s70
    %s72 = sphi 0, %s70
    %s73 = sphi 0, %s72
    %s87 = sphi 0, %s73
    %s91 = sphi 0, %s91
    %s93 = sphi 0, %s91
    %s94 = sphi 0, %s93
    %s108 = sphi 0, %s94
    %s112 = sphi 0, %s112
    %s114 = sphi 0, %s112
    %s115 = sphi 0, %s114
    %s129 = sphi 0, %s115
    %s133 = sphi 0, %s133
    %s135 = sphi 0, %s133
    %s136 = sphi 0, %s135
    %s150 = sphi 0, %s136
    %s154 = sphi 0, %s154
    %s156 = sphi 0, %s154
    %s157 = sphi 0, %s156
    %s171 = sphi 0, %s157
    %s175 = sphi 0, %s175
    %s177 = sphi 0, %s175
    %s178 = sphi 0, %s177
    %s192 = sphi 0, %s178
    %s196 = sphi 0, %s196
    %s198 = sphi 0, %s196
    %s199 = sphi 0, %s198
    %s213 = sphi 0, %s199
    %s219 = sphi 0, %s221
    %s222 = sphi 0, %s219
    %s223 = sphi 0, %s222
    %s239 = sphi 0, %s223
  $region4: #{minionn_forward.1} parent=0 // loop_header_branch
    %18 = sbr.rel (%p16) target = $region8
  $region5: #{minionn_forward.1} parent=0 // loop_body
    %s20 = ssub.s32 %s15, 1
    %s21 = ssub.s32 %s15, 2
    %s22 = sadd.s32 %s15, 1
    %s23 = ssub.s32 %s15, %s22
    %p24 = scmp.eq.s32.totalorder %s23, 0
    %s26 = sadd.s32 %s25, 1
    %s27 = scalar_select %p24, %s25, %s26
    %p30 = pneg %p24
    %p31 = scmp.eq.s32.totalorder %s15, 1
    %p32 = por %p30, %p31
    %p33 = scmp.ne.s32.totalorder %s25, %s28
    %p34 = scmp.eq.s32.totalorder %s15, 0
    %p35 = por %p33, %p34
    %p36 = scmp.ne.s32.totalorder %s25, %s28
    %p37 = scmp.eq.s32.totalorder %s20, 1
    %p38 = por %p36, %p37
    %p39 = scmp.ne.s32.totalorder %s28, %s29
    %p40 = scmp.eq.s32.totalorder %s20, 0
    %p41 = por %p39, %p40
    %p42 = scmp.ne.s32.totalorder %s28, %s29
    %p43 = scmp.eq.s32.totalorder %s21, 1
    %p44 = por %p42, %p43
    %p46 = scmp.ne.s32.totalorder %s29, %s45
    %p47 = scmp.eq.s32.totalorder %s21, 0
    %p48 = por %p46, %p47
    %s50 = sadd.s32 %s49, 1
    %p53 = scmp.eq.s32.totalorder %s15, 1
    %p54 = scmp.ne.s32.totalorder %s49, %s51
    %p55 = scmp.eq.s32.totalorder %s15, 0
    %p56 = por %p54, %p55
    %p57 = scmp.ne.s32.totalorder %s49, %s51
    %p58 = scmp.eq.s32.totalorder %s20, 1
    %p59 = por %p57, %p58
    %p60 = scmp.ne.s32.totalorder %s51, %s52
    %p61 = scmp.eq.s32.totalorder %s20, 0
    %p62 = por %p60, %p61
    %p63 = scmp.ne.s32.totalorder %s51, %s52
    %p64 = scmp.eq.s32.totalorder %s21, 1
    %p65 = por %p63, %p64
    %p67 = scmp.ne.s32.totalorder %s52, %s66
    %p68 = scmp.eq.s32.totalorder %s21, 0
    %p69 = por %p67, %p68
    %s71 = sadd.s32 %s70, 1
    %p74 = scmp.eq.s32.totalorder %s15, 1
    %p75 = scmp.ne.s32.totalorder %s70, %s72
    %p76 = scmp.eq.s32.totalorder %s15, 0
    %p77 = por %p75, %p76
    %p78 = scmp.ne.s32.totalorder %s70, %s72
    %p79 = scmp.eq.s32.totalorder %s20, 1
    %p80 = por %p78, %p79
    %p81 = scmp.ne.s32.totalorder %s72, %s73
    %p82 = scmp.eq.s32.totalorder %s20, 0
    %p83 = por %p81, %p82
    %p84 = scmp.ne.s32.totalorder %s72, %s73
    %p85 = scmp.eq.s32.totalorder %s21, 1
    %p86 = por %p84, %p85
    %p88 = scmp.ne.s32.totalorder %s73, %s87
    %p89 = scmp.eq.s32.totalorder %s21, 0
    %p90 = por %p88, %p89
    %s92 = sadd.s32 %s91, 1
    %p95 = scmp.eq.s32.totalorder %s15, 1
    %p96 = scmp.ne.s32.totalorder %s91, %s93
    %p97 = scmp.eq.s32.totalorder %s15, 0
    %p98 = por %p96, %p97
    %p99 = scmp.ne.s32.totalorder %s91, %s93
    %p100 = scmp.eq.s32.totalorder %s20, 1
    %p101 = por %p99, %p100
    %p102 = scmp.ne.s32.totalorder %s93, %s94
    %p103 = scmp.eq.s32.totalorder %s20, 0
    %p104 = por %p102, %p103
    %p105 = scmp.ne.s32.totalorder %s93, %s94
    %p106 = scmp.eq.s32.totalorder %s21, 1
    %p107 = por %p105, %p106
    %p109 = scmp.ne.s32.totalorder %s94, %s108
    %p110 = scmp.eq.s32.totalorder %s21, 0
    %p111 = por %p109, %p110
    %s113 = sadd.s32 %s112, 1
    %p116 = scmp.eq.s32.totalorder %s15, 1
    %p117 = scmp.ne.s32.totalorder %s112, %s114
    %p118 = scmp.eq.s32.totalorder %s15, 0
    %p119 = por %p117, %p118
    %p120 = scmp.ne.s32.totalorder %s112, %s114
    %p121 = scmp.eq.s32.totalorder %s20, 1
    %p122 = por %p120, %p121
    %p123 = scmp.ne.s32.totalorder %s114, %s115
    %p124 = scmp.eq.s32.totalorder %s20, 0
    %p125 = por %p123, %p124
    %p126 = scmp.ne.s32.totalorder %s114, %s115
    %p127 = scmp.eq.s32.totalorder %s21, 1
    %p128 = por %p126, %p127
    %p130 = scmp.ne.s32.totalorder %s115, %s129
    %p131 = scmp.eq.s32.totalorder %s21, 0
    %p132 = por %p130, %p131
    %s134 = sadd.s32 %s133, 1
    %p137 = scmp.eq.s32.totalorder %s15, 1
    %p138 = scmp.ne.s32.totalorder %s133, %s135
    %p139 = scmp.eq.s32.totalorder %s15, 0
    %p140 = por %p138, %p139
    %p141 = scmp.ne.s32.totalorder %s133, %s135
    %p142 = scmp.eq.s32.totalorder %s20, 1
    %p143 = por %p141, %p142
    %p144 = scmp.ne.s32.totalorder %s135, %s136
    %p145 = scmp.eq.s32.totalorder %s20, 0
    %p146 = por %p144, %p145
    %p147 = scmp.ne.s32.totalorder %s135, %s136
    %p148 = scmp.eq.s32.totalorder %s21, 1
    %p149 = por %p147, %p148
    %p151 = scmp.ne.s32.totalorder %s136, %s150
    %p152 = scmp.eq.s32.totalorder %s21, 0
    %p153 = por %p151, %p152
    %s155 = sadd.s32 %s154, 1
    %p158 = scmp.eq.s32.totalorder %s15, 1
    %p159 = scmp.ne.s32.totalorder %s154, %s156
    %p160 = scmp.eq.s32.totalorder %s15, 0
    %p161 = por %p159, %p160
    %p162 = scmp.ne.s32.totalorder %s154, %s156
    %p163 = scmp.eq.s32.totalorder %s20, 1
    %p164 = por %p162, %p163
    %p165 = scmp.ne.s32.totalorder %s156, %s157
    %p166 = scmp.eq.s32.totalorder %s20, 0
    %p167 = por %p165, %p166
    %p168 = scmp.ne.s32.totalorder %s156, %s157
    %p169 = scmp.eq.s32.totalorder %s21, 1
    %p170 = por %p168, %p169
    %p172 = scmp.ne.s32.totalorder %s157, %s171
    %p173 = scmp.eq.s32.totalorder %s21, 0
    %p174 = por %p172, %p173
    %s176 = sadd.s32 %s175, 1
    %p179 = scmp.eq.s32.totalorder %s15, 1
    %p180 = scmp.ne.s32.totalorder %s175, %s177
    %p181 = scmp.eq.s32.totalorder %s15, 0
    %p182 = por %p180, %p181
    %p183 = scmp.ne.s32.totalorder %s175, %s177
    %p184 = scmp.eq.s32.totalorder %s20, 1
    %p185 = por %p183, %p184
    %p186 = scmp.ne.s32.totalorder %s177, %s178
    %p187 = scmp.eq.s32.totalorder %s20, 0
    %p188 = por %p186, %p187
    %p189 = scmp.ne.s32.totalorder %s177, %s178
    %p190 = scmp.eq.s32.totalorder %s21, 1
    %p191 = por %p189, %p190
    %p193 = scmp.ne.s32.totalorder %s178, %s192
    %p194 = scmp.eq.s32.totalorder %s21, 0
    %p195 = por %p193, %p194
    %s197 = sadd.s32 %s196, 1
    %p200 = scmp.eq.s32.totalorder %s15, 1
    %p201 = scmp.ne.s32.totalorder %s196, %s198
    %p202 = scmp.eq.s32.totalorder %s15, 0
    %p203 = por %p201, %p202
    %p204 = scmp.ne.s32.totalorder %s196, %s198
    %p205 = scmp.eq.s32.totalorder %s20, 1
    %p206 = por %p204, %p205
    %p207 = scmp.ne.s32.totalorder %s198, %s199
    %p208 = scmp.eq.s32.totalorder %s20, 0
    %p209 = por %p207, %p208
    %p210 = scmp.ne.s32.totalorder %s198, %s199
    %p211 = scmp.eq.s32.totalorder %s21, 1
    %p212 = por %p210, %p211
    %p214 = scmp.ne.s32.totalorder %s199, %s213
    %p215 = scmp.eq.s32.totalorder %s21, 0
    %p216 = por %p214, %p215
    %s217 = ssub.s32 %s15, %s22
    %p218 = scmp.eq.s32.totalorder %s217, 0
    %s220 = sadd.s32 %s219, 1
    %s221 = scalar_select %p218, %s219, %s220
    %p224 = pneg %p218
    %p225 = scmp.eq.s32.totalorder %s15, 1
    %p226 = por %p224, %p225
    %p227 = scmp.ne.s32.totalorder %s219, %s222
    %p228 = scmp.eq.s32.totalorder %s15, 0
    %p229 = por %p227, %p228
    %p230 = scmp.ne.s32.totalorder %s219, %s222
    %p231 = scmp.eq.s32.totalorder %s20, 1
    %p232 = por %p230, %p231
    %p233 = scmp.ne.s32.totalorder %s222, %s223
    %p234 = scmp.eq.s32.totalorder %s20, 0
    %p235 = por %p233, %p234
    %p236 = scmp.ne.s32.totalorder %s222, %s223
    %p237 = scmp.eq.s32.totalorder %s21, 1
    %p238 = por %p236, %p237
    %p240 = scmp.ne.s32.totalorder %s223, %s239
    %p241 = scmp.eq.s32.totalorder %s21, 0
    %p242 = por %p240, %p241
    %p243 = scmp.le.s32.totalorder 1, %s15
    %p244 = scmp.lt.s32.totalorder %s15, 3
    %p245 = pnand %p243, %p244
    %p246 = pneg %p245
    // Predicated region
    $region9: #{minionn_forward.1} parent=5 // pred_check
      _
    $region10: #{minionn_forward.1} parent=5 // pred_check_branch
      %248 = sbr.rel (%p245) target = $region12
    $region11: #{minionn_forward.1} parent=5 // pred_region
      %s249 = ssub.s32 %s15, 1
      // Predicated region
      $region13: #{minionn_forward.1} parent=11 // pred_check
        %p250 = pneg %p62
      $region14: #{minionn_forward.1} parent=11 // pred_check_branch
        %252 = sbr.rel (%p250) target = $region16
      $region15: #{minionn_forward.1} parent=11 // pred_region
        _
      $region16: #{minionn_forward.1} parent=11 // pred_fallthru
        _
      // Predicated region
      $region17: #{minionn_forward.1} parent=11 // pred_check
        %p253 = pneg %p83
      $region18: #{minionn_forward.1} parent=11 // pred_check_branch
        %255 = sbr.rel (%p253) target = $region20
      $region19: #{minionn_forward.1} parent=11 // pred_region
        _
      $region20: #{minionn_forward.1} parent=11 // pred_fallthru
        _
      // Predicated region
      $region21: #{minionn_forward.1} parent=11 // pred_check
        %p256 = pneg %p104
      $region22: #{minionn_forward.1} parent=11 // pred_check_branch
        %258 = sbr.rel (%p256) target = $region24
      $region23: #{minionn_forward.1} parent=11 // pred_region
        _
      $region24: #{minionn_forward.1} parent=11 // pred_fallthru
        _
      // Predicated region
      $region25: #{minionn_forward.1} parent=11 // pred_check
        %p259 = pneg %p125
      $region26: #{minionn_forward.1} parent=11 // pred_check_branch
        %261 = sbr.rel (%p259) target = $region28
      $region27: #{minionn_forward.1} parent=11 // pred_region
        _
      $region28: #{minionn_forward.1} parent=11 // pred_fallthru
        _
      // Predicated region
      $region29: #{minionn_forward.1} parent=11 // pred_check
        %p262 = pneg %p146
      $region30: #{minionn_forward.1} parent=11 // pred_check_branch
        %264 = sbr.rel (%p262) target = $region32
      $region31: #{minionn_forward.1} parent=11 // pred_region
        _
      $region32: #{minionn_forward.1} parent=11 // pred_fallthru
        _
      // Predicated region
      $region33: #{minionn_forward.1} parent=11 // pred_check
        %p265 = pneg %p167
      $region34: #{minionn_forward.1} parent=11 // pred_check_branch
        %267 = sbr.rel (%p265) target = $region36
      $region35: #{minionn_forward.1} parent=11 // pred_region
        _
      $region36: #{minionn_forward.1} parent=11 // pred_fallthru
        _
      // Predicated region
      $region37: #{minionn_forward.1} parent=11 // pred_check
        %p268 = pneg %p188
      $region38: #{minionn_forward.1} parent=11 // pred_check_branch
        %270 = sbr.rel (%p268) target = $region40
      $region39: #{minionn_forward.1} parent=11 // pred_region
        _
      $region40: #{minionn_forward.1} parent=11 // pred_fallthru
        _
      // Predicated region
      $region41: #{minionn_forward.1} parent=11 // pred_check
        %p271 = pneg %p209
      $region42: #{minionn_forward.1} parent=11 // pred_check_branch
        %273 = sbr.rel (%p271) target = $region44
      $region43: #{minionn_forward.1} parent=11 // pred_region
        _
      $region44: #{minionn_forward.1} parent=11 // pred_fallthru
        _
    $region12: #{minionn_forward.1} parent=5 // pred_fallthru
      _
    %p274 = scmp.lt.s32.totalorder %s15, 2
    // Predicated region
    $region45: #{minionn_forward.1} parent=5 // pred_check
      %p275 = pneg %p274
    $region46: #{minionn_forward.1} parent=5 // pred_check_branch
      %277 = sbr.rel (%p275) target = $region48
    $region47: #{minionn_forward.1} parent=5 // pred_region
      // Predicated region
      $region49: #{minionn_forward.1} parent=47 // pred_check
        %p278 = pneg %p35
      $region50: #{minionn_forward.1} parent=47 // pred_check_branch
        %280 = sbr.rel (%p278) target = $region52
      $region51: #{minionn_forward.1} parent=47 // pred_region
        %p281 = scmp.lt.s32.totalorder %s15, 1
        %s282 = scalar_select %p281, %s15, 1
        %s283 = smul.addr %s282, 4
        %s284 = smul.addr %s283, 8
        %s285 = scalar_lea.vmem %s0, %s284
      $region52: #{minionn_forward.1} parent=47 // pred_fallthru
        _
    $region48: #{minionn_forward.1} parent=5 // pred_fallthru
      _
    %p286 = scmp.le.s32.totalorder 1, %s15
    %p287 = scmp.lt.s32.totalorder %s15, 3
    %p288 = pnand %p286, %p287
    %p289 = pneg %p288
    // Predicated region
    $region53: #{minionn_forward.1} parent=5 // pred_check
      _
    $region54: #{minionn_forward.1} parent=5 // pred_check_branch
      %291 = sbr.rel (%p288) target = $region56
    $region55: #{minionn_forward.1} parent=5 // pred_region
      %s292 = ssub.s32 %s15, 1
      %p293 = scmp.lt.s32.totalorder %s20, 1
      %s294 = scalar_select %p293, %s20, 1
      %s295 = smul.addr %s294, 4
      %s296 = smul.addr %s295, 8
      %s297 = scalar_lea.vmem %s0, %s296
      %p298 = pneg %p41
      %p299 = pneg %p38
      %p300 = pneg %p62
      %p301 = pneg %p59
      %p302 = pneg %p83
      %p303 = pneg %p80
      %p304 = pneg %p104
      %p305 = pneg %p101
      %p306 = pneg %p125
      %p307 = pneg %p122
      %p308 = pneg %p146
      %p309 = pneg %p143
      %p310 = pneg %p167
      %p311 = pneg %p164
      %p312 = pneg %p188
      %p313 = pneg %p185
      %p314 = pneg %p209
      %p315 = pneg %p206
      %p316 = pneg %p235
      %p317 = pneg %p232
      %p318 = scmp.lt.s32.totalorder %s20, 1
      %s319 = scalar_select %p318, %s20, 1
      %s320 = smul.addr %s319, 2
      %s321 = smul.addr %s320, 8
      %s322 = scalar_lea.vmem %s9, %s321
      %p323 = scmp.lt.s32.totalorder %s20, 1
      %s324 = scalar_select %p323, %s20, 1
      %s325 = smul.addr %s324, 4
      %s326 = smul.addr %s325, 8
      %s327 = scalar_lea.vmem %s0, %s326
      %p328 = scmp.lt.s32.totalorder %s20, 1
      %s329 = scalar_select %p328, %s20, 1
      %s330 = smul.addr %s329, 2
      %s331 = smul.addr %s330, 8
      %s332 = scalar_lea.vmem %s9, %s331
      %v333 = vld [vmem:[%s327] sm:$0xff]
      %v334 = vld [vmem:[%s327 + $0x8] sm:$0xff]
      %v335 = vld [vmem:[%s327 + $0x10] sm:$0xff]
      %v336 = vld [vmem:[%s327 + $0x18] sm:$0xf]
      %vm341 = vcmask 1046528
      %v342 = vrot.slane %v333, 1
      %v343 = vrot.slane %v334, 1
      %v344 = vsel %vm341, %v342, %v343
      %v345 = vrot.slane %v335, 1
      %v346 = vsel %vm341, %v343, %v345
      %v347 = vrot.slane %v336, 1
      %v348 = vsel %vm341, %v345, %v347
      %349 = vrot.lane.b32.xlu0 %v344, 28
      %v350 = vpop.permute.xlu0 %349
      %351 = vrot.lane.b32.xlu0 %v346, 28
      %v352 = vpop.permute.xlu0 %351
      %353 = vrot.lane.b32.xlu0 %v348, 28
      %v354 = vpop.permute.xlu0 %353
      %vm358 = vcmask 1045504
      %v359 = vrot.slane %v333, 2
      %v360 = vrot.slane %v334, 2
      %v361 = vsel %vm358, %v359, %v360
      %v362 = vrot.slane %v335, 2
      %v363 = vsel %vm358, %v360, %v362
      %v364 = vrot.slane %v336, 2
      %v365 = vsel %vm358, %v362, %v364
      %366 = vrot.lane.b32.xlu0 %v361, 56
      %v367 = vpop.permute.xlu0 %366
      %368 = vrot.lane.b32.xlu0 %v363, 56
      %v369 = vpop.permute.xlu0 %368
      %370 = vrot.lane.b32.xlu0 %v365, 56
      %v371 = vpop.permute.xlu0 %370
      %vm375 = vcmask 1044480
      %v376 = vrot.slane %v333, 3
      %v377 = vrot.slane %v334, 3
      %v378 = vsel %vm375, %v376, %v377
      %v379 = vrot.slane %v335, 3
      %v380 = vsel %vm375, %v377, %v379
      %v381 = vrot.slane %v336, 3
      %v382 = vsel %vm375, %v379, %v381
      %383 = vrot.lane.b32.xlu0 %v378, 84
      %v384 = vpop.permute.xlu0 %383
      %385 = vrot.lane.b32.xlu0 %v380, 84
      %v386 = vpop.permute.xlu0 %385
      %387 = vrot.lane.b32.xlu0 %v382, 84
      %v388 = vpop.permute.xlu0 %387
      %vm392 = vcmask 1043456
      %v393 = vrot.slane %v333, 4
      %v394 = vrot.slane %v334, 4
      %v395 = vsel %vm392, %v393, %v394
      %v396 = vrot.slane %v335, 4
      %v397 = vsel %vm392, %v394, %v396
      %v398 = vrot.slane %v336, 4
      %v399 = vsel %vm392, %v396, %v398
      %400 = vrot.lane.b32.xlu0 %v395, 112
      %v401 = vpop.permute.xlu0 %400
      %402 = vrot.lane.b32.xlu0 %v397, 112
      %v403 = vpop.permute.xlu0 %402
      %404 = vrot.lane.b32.xlu0 %v399, 112
      %v405 = vpop.permute.xlu0 %404
      %vm409 = vcmask 228352
      %v410 = vsel %vm409, %v333, %v350
      %v411 = vsel %vm409, %v334, %v352
      %v412 = vsel %vm409, %v335, %v354
      %vm413 = vcmask 457728
      %v414 = vsel %vm413, %v410, %v367
      %v415 = vsel %vm413, %v411, %v369
      %v416 = vsel %vm413, %v412, %v371
      %vm417 = vcmask 687104
      %v418 = vsel %vm417, %v414, %v384
      %v419 = vsel %vm417, %v415, %v386
      %v420 = vsel %vm417, %v416, %v388
      %vm421 = vcmask 916480
      %v422 = vsel %vm421, %v418, %v401
      %v423 = vsel %vm421, %v419, %v403
      %v424 = vsel %vm421, %v420, %v405
      %v425 = vld [vmem:[%s1] sm:$0xff]
      %v426 = vld [vmem:[%s1 + $0x8] sm:$0xff]
      %v427 = vld [vmem:[%s1 + $0x10] sm:$0xff]
      %v428 = vld [vmem:[%s1 + $0x18] sm:$0xff]
      %v429 = vld [vmem:[%s1 + $0x20] sm:$0xff]
      %v430 = vld [vmem:[%s1 + $0x28] sm:$0xff]
      %v431 = vld [vmem:[%s1 + $0x30] sm:$0xff]
      %v432 = vld [vmem:[%s1 + $0x38] sm:$0xff]
      %v433 = vld [vmem:[%s1 + $0x40] sm:$0xff]
      %v434 = vld [vmem:[%s1 + $0x48] sm:$0xff]
      %v435 = vld [vmem:[%s1 + $0x50] sm:$0xff]
      %v436 = vld [vmem:[%s1 + $0x58] sm:$0xff]
      %v437 = vld [vmem:[%s1 + $0x60] sm:$0xff]
      %v438 = vld [vmem:[%s1 + $0x68] sm:$0xff]
      %v439 = vld [vmem:[%s1 + $0x70] sm:$0xff]
      %v440 = vld [vmem:[%s1 + $0x78] sm:$0xff]
      %v441 = vld [vmem:[%s1 + $0x80] sm:$0xff]
      %v442 = vld [vmem:[%s1 + $0x88] sm:$0xff]
      %v443 = vld [vmem:[%s1 + $0x90] sm:$0xff]
      %v444 = vld [vmem:[%s1 + $0x98] sm:$0xff]
      %v445 = vld [vmem:[%s1 + $0xa0] sm:$0xff]
      %v446 = vld [vmem:[%s1 + $0xa8] sm:$0xff]
      %v447 = vld [vmem:[%s1 + $0xb0] sm:$0xff]
      %v448 = vld [vmem:[%s1 + $0xb8] sm:$0xff]
      %v449 = vld [vmem:[%s1 + $0xc0] sm:$0xff]
      %v450 = vld [vmem:[%s1 + $0xc8] sm:$0xff]
      %v451 = vld [vmem:[%s1 + $0xd0] sm:$0xff]
      %v452 = vld [vmem:[%s1 + $0xd8] sm:$0xff]
      %v453 = vld [vmem:[%s1 + $0xe0] sm:$0xff]
      %v454 = vld [vmem:[%s1 + $0xe8] sm:$0xff]
      %v455 = vld [vmem:[%s1 + $0xf0] sm:$0xff]
      %v456 = vld [vmem:[%s1 + $0xf8] sm:$0xff]
      %v457 = vld [vmem:[%s1 + $0x100] sm:$0xff]
      %v458 = vld [vmem:[%s1 + $0x108] sm:$0xff]
      %v459 = vld [vmem:[%s1 + $0x110] sm:$0xff]
      %v460 = vld [vmem:[%s1 + $0x118] sm:$0xff]
      %v461 = vld [vmem:[%s1 + $0x120] sm:$0xff]
      %v462 = vld [vmem:[%s1 + $0x128] sm:$0xff]
      %v463 = vld [vmem:[%s1 + $0x130] sm:$0xff]
      %v464 = vld [vmem:[%s1 + $0x138] sm:$0xff]
      %v465 = vld [vmem:[%s1 + $0x140] sm:$0xff]
      %v466 = vld [vmem:[%s1 + $0x148] sm:$0xff]
      %v467 = vld [vmem:[%s1 + $0x150] sm:$0xff]
      %v468 = vld [vmem:[%s1 + $0x158] sm:$0xff]
      %v469 = vld [vmem:[%s1 + $0x160] sm:$0xff]
      %v470 = vld [vmem:[%s1 + $0x168] sm:$0xff]
      %v471 = vld [vmem:[%s1 + $0x170] sm:$0xff]
      %v472 = vld [vmem:[%s1 + $0x178] sm:$0xff]
      %v473 = vld [vmem:[%s1 + $0x180] sm:$0xff]
      %v474 = vld [vmem:[%s1 + $0x188] sm:$0xff]
      %v475 = vld [vmem:[%s1 + $0x190] sm:$0xff]
      %v476 = vld [vmem:[%s1 + $0x198] sm:$0xf]
      %v477 = vld [vmem:[%s1 + $0x1a0] sm:$0xf]
      %v478 = vld [vmem:[%s1 + $0x1a8] sm:$0xf]
      %v479 = vld [vmem:[%s2] sm:$0x7]
      %v481 = vlaneseq
      %v482 = vshrl.u32 %v481, 7
      %v483 = vsub.s32 0, %v482
      %v484 = vrot.slane %v479, %v483
      %v485 = vlaneseq
      %v486 = vshrl.u32 %v485, 7
      %v487 = vsub.s32 1, %v486
      %v488 = vrot.slane %v479, %v487
      %v489 = vlaneseq
      %v490 = vshrl.u32 %v489, 7
      %v491 = vsub.s32 2, %v490
      %v492 = vrot.slane %v479, %v491
      %vm496 = vcmask 97280
      %v497 = vsel %vm496, %v401, 0
      %v499 = vsel %vm496, %v403, 0
      %v501 = vsel %vm496, %v405, 0
      %v504 = vsel %vm392, %v476, 0
      %v507 = vsel %vm392, %v477, 0
      %v510 = vsel %vm392, %v478, 0
      %512 = vmatprep.subr.mxu0 %v426
      %513 = vmatpush1.msra.mxu0 %v425
      %514 = vmatprep.subr.mxu0 %v429
      %515 = vmatpush1.msra.mxu0 %v428
      %516 = vmatprep.subr.mxu0 %v432
      %517 = vmatpush1.msra.mxu0 %v431
      %518 = vmatprep.subr.mxu0 %v435
      %519 = vmatpush1.msra.mxu0 %v434
      %520 = vmatprep.subr.mxu0 %v438
      %521 = vmatpush1.msra.mxu0 %v437
      %522 = vmatprep.subr.mxu0 %v441
      %523 = vmatpush1.msra.mxu0 %v440
      %524 = vmatprep.subr.mxu0 %v444
      %525 = vmatpush1.msra.mxu0 %v443
      %526 = vmatprep.subr.mxu0 %v447
      %527 = vmatpush1.msra.mxu0 %v446
      %528 = vmatprep.subr.mxu0 %v450
      %529 = vmatpush1.msra.mxu0 %v449
      %530 = vmatprep.subr.mxu0 %v453
      %531 = vmatpush1.msra.mxu0 %v452
      %532 = vmatprep.subr.mxu0 %v456
      %533 = vmatpush1.msra.mxu0 %v455
      %534 = vmatprep.subr.mxu0 %v459
      %535 = vmatpush1.msra.mxu0 %v458
      %536 = vmatprep.subr.mxu0 %v462
      %537 = vmatpush1.msra.mxu0 %v461
      %538 = vmatprep.subr.mxu0 %v465
      %539 = vmatpush1.msra.mxu0 %v464
      %540 = vmatprep.subr.mxu0 %v468
      %541 = vmatpush1.msra.mxu0 %v467
      %542 = vmatprep.subr.mxu0 %v471
      %543 = vmatpush1.msra.mxu0 %v470
      %544 = vmatprep.subr.mxu0 %v474
      %545 = vmatpush1.msra.mxu0 %v473
      %546 = vmatprep.subr.mxu0 %v507
      %547 = vmatpush1.msra.mxu0 %v504
      %548 = vmatprep.subr.mxu0 0.0
      %549 = vmatpush1.msra.mxu0 0.0
      %550 = vmatprep.subr.mxu0 0.0
      %551 = vmatpush1.msra.mxu0 0.0
      %552 = vmatprep.subr.mxu0 0.0
      %553 = vmatpush1.msra.mxu0 0.0
      %554 = vmatprep.subr.mxu0 0.0
      %555 = vmatpush1.msra.mxu0 0.0
      %556 = vmatprep.subr.mxu0 0.0
      %557 = vmatpush1.msra.mxu0 0.0
      %558 = vmatprep.subr.mxu0 0.0
      %559 = vmatpush1.msra.mxu0 0.0
      %560 = vmatprep.subr.mxu0 0.0
      %561 = vmatpush1.msra.mxu0 0.0
      %562 = vmatprep.subr.mxu0 0.0
      %563 = vmatpush1.msra.mxu0 0.0
      %564 = vmatprep.subr.mxu0 0.0
      %565 = vmatpush1.msra.mxu0 0.0
      %566 = vmatprep.subr.mxu0 0.0
      %567 = vmatpush1.msra.mxu0 0.0
      %568 = vmatprep.subr.mxu0 0.0
      %569 = vmatpush1.msra.mxu0 0.0
      %570 = vmatprep.subr.mxu0 0.0
      %571 = vmatpush1.msra.mxu0 0.0
      %572 = vmatprep.subr.mxu0 0.0
      %573 = vmatpush1.msra.mxu0 0.0
      %574 = vmatprep.subr.mxu0 0.0
      %575 = vmatpush1.msra.mxu0 0.0
      %576 = vmatprep.mubr.f32.mxu0 %v497
      %577 = vmatmul.mubr.f32.gmra.mrb[0].mxu0 %v422
      %v578 = vpop.f32.mrb[0].mxu0
      %v579 = vadd.f32 %v484, %v578
      %v580 = vpop.f32.mrb[0].mxu0
      %v581 = vadd.f32 %v488, %v580
      %582 = vmatprep.mubr.f32.mxu0 %v499
      %583 = vmatmul.mubr.f32.gmra.mrb[0].mxu0 %v423
      %v584 = vpop.f32.mrb[0].mxu0
      %v585 = vadd.f32 %v484, %v584
      %v586 = vpop.f32.mrb[0].mxu0
      %v587 = vadd.f32 %v488, %v586
      %588 = vmatprep.mubr.f32.mxu0 %v501
      %589 = vmatmul.mubr.f32.gmra.mrb[0].mxu0 %v424
      %v590 = vpop.f32.mrb[0].mxu0
      %v591 = vadd.f32 %v484, %v590
      %v592 = vpop.f32.mrb[0].mxu0
      %v593 = vadd.f32 %v488, %v592
      %594 = vdwg.mxu0
      %595 = vmatprep.subr.mxu0 0.0
      %596 = vmatpush1.msra.mxu0 %v427
      %597 = vmatprep.subr.mxu0 0.0
      %598 = vmatpush1.msra.mxu0 %v430
      %599 = vmatprep.subr.mxu0 0.0
      %600 = vmatpush1.msra.mxu0 %v433
      %601 = vmatprep.subr.mxu0 0.0
      %602 = vmatpush1.msra.mxu0 %v436
      %603 = vmatprep.subr.mxu0 0.0
      %604 = vmatpush1.msra.mxu0 %v439
      %605 = vmatprep.subr.mxu0 0.0
      %606 = vmatpush1.msra.mxu0 %v442
      %607 = vmatprep.subr.mxu0 0.0
      %608 = vmatpush1.msra.mxu0 %v445
      %609 = vmatprep.subr.mxu0 0.0
      %610 = vmatpush1.msra.mxu0 %v448
      %611 = vmatprep.subr.mxu0 0.0
      %612 = vmatpush1.msra.mxu0 %v451
      %613 = vmatprep.subr.mxu0 0.0
      %614 = vmatpush1.msra.mxu0 %v454
      %615 = vmatprep.subr.mxu0 0.0
      %616 = vmatpush1.msra.mxu0 %v457
      %617 = vmatprep.subr.mxu0 0.0
      %618 = vmatpush1.msra.mxu0 %v460
      %619 = vmatprep.subr.mxu0 0.0
      %620 = vmatpush1.msra.mxu0 %v463
      %621 = vmatprep.subr.mxu0 0.0
      %622 = vmatpush1.msra.mxu0 %v466
      %623 = vmatprep.subr.mxu0 0.0
      %624 = vmatpush1.msra.mxu0 %v469
      %625 = vmatprep.subr.mxu0 0.0
      %626 = vmatpush1.msra.mxu0 %v472
      %627 = vmatprep.subr.mxu0 0.0
      %628 = vmatpush1.msra.mxu0 %v475
      %629 = vmatprep.subr.mxu0 0.0
      %630 = vmatpush1.msra.mxu0 %v510
      %631 = vmatprep.subr.mxu0 0.0
      %632 = vmatpush1.msra.mxu0 0.0
      %633 = vmatprep.subr.mxu0 0.0
      %634 = vmatpush1.msra.mxu0 0.0
      %635 = vmatprep.subr.mxu0 0.0
      %636 = vmatpush1.msra.mxu0 0.0
      %637 = vmatprep.subr.mxu0 0.0
      %638 = vmatpush1.msra.mxu0 0.0
      %639 = vmatprep.subr.mxu0 0.0
      %640 = vmatpush1.msra.mxu0 0.0
      %641 = vmatprep.subr.mxu0 0.0
      %642 = vmatpush1.msra.mxu0 0.0
      %643 = vmatprep.subr.mxu0 0.0
      %644 = vmatpush1.msra.mxu0 0.0
      %645 = vmatprep.subr.mxu0 0.0
      %646 = vmatpush1.msra.mxu0 0.0
      %647 = vmatprep.subr.mxu0 0.0
      %648 = vmatpush1.msra.mxu0 0.0
      %649 = vmatprep.subr.mxu0 0.0
      %650 = vmatpush1.msra.mxu0 0.0
      %651 = vmatprep.subr.mxu0 0.0
      %652 = vmatpush1.msra.mxu0 0.0
      %653 = vmatprep.subr.mxu0 0.0
      %654 = vmatpush1.msra.mxu0 0.0
      %655 = vmatprep.subr.mxu0 0.0
      %656 = vmatpush1.msra.mxu0 0.0
      %657 = vmatprep.subr.mxu0 0.0
      %658 = vmatpush1.msra.mxu0 0.0
      %659 = vmatprep.mubr.f32.mxu0 %v497
      %660 = vmatmul.mubr.f32.gmra.mrb[0].mxu0 %v422
      %v661 = vpop.f32.mrb[0].mxu0
      %v662 = vadd.f32 %v492, %v661
      %v663 = vpop.f32.mrb[0].mxu0
      %664 = vmatprep.mubr.f32.mxu0 %v499
      %665 = vmatmul.mubr.f32.gmra.mrb[0].mxu0 %v423
      %v666 = vpop.f32.mrb[0].mxu0
      %v667 = vadd.f32 %v492, %v666
      %v668 = vpop.f32.mrb[0].mxu0
      %669 = vmatprep.mubr.f32.mxu0 %v501
      %670 = vmatmul.mubr.f32.gmra.mrb[0].mxu0 %v424
      %v671 = vpop.f32.mrb[0].mxu0
      %v672 = vadd.f32 %v492, %v671
      %v673 = vpop.f32.mrb[0].mxu0
      %674 = vdwg.mxu0
      %v675 = vmax.f32 %v579, 0.0
      %v676 = vmax.f32 %v581, 0.0
      %v677 = vmax.f32 %v662, 0.0
      %v678 = vmax.f32 %v585, 0.0
      %v679 = vmax.f32 %v587, 0.0
      %v680 = vmax.f32 %v667, 0.0
      %v681 = vmax.f32 %v591, 0.0
      %v682 = vmax.f32 %v593, 0.0
      %v683 = vmax.f32 %v672, 0.0
      %v693 = vrot.slane %v675, 1
      %v694 = vrot.slane %v678, 1
      %v695 = vsel %vm341, %v693, %v694
      %v696 = vrot.slane %v676, 1
      %v697 = vrot.slane %v679, 1
      %v698 = vsel %vm341, %v696, %v697
      %v699 = vrot.slane %v677, 1
      %v700 = vrot.slane %v680, 1
      %v701 = vsel %vm341, %v699, %v700
      %v702 = vrot.slane %v681, 1
      %v703 = vsel %vm341, %v694, %v702
      %v704 = vrot.slane %v682, 1
      %v705 = vsel %vm341, %v697, %v704
      %v706 = vrot.slane %v683, 1
      %v707 = vsel %vm341, %v700, %v706
      %v720 = vsel %vm341, %v702, %v693
      %v721 = vsel %vm341, %v704, %v696
      %v722 = vsel %vm341, %v706, %v699
      %v723 = vmax.f32 %v675, %v695
      %v724 = vmax.f32 %v676, %v698
      %v725 = vmax.f32 %v677, %v701
      %v726 = vmax.f32 %v678, %v703
      %v727 = vmax.f32 %v679, %v705
      %v728 = vmax.f32 %v680, %v707
      %v729 = vmax.f32 %v681, %v720
      %v730 = vmax.f32 %v682, %v721
      %v731 = vmax.f32 %v683, %v722
      %741 = vrot.lane.b32.xlu0 %v723, 112
      %v742 = vpop.permute.xlu0 %741
      %743 = vrot.lane.b32.xlu0 %v724, 112
      %v744 = vpop.permute.xlu0 %743
      %745 = vrot.lane.b32.xlu0 %v725, 112
      %v746 = vpop.permute.xlu0 %745
      %747 = vrot.lane.b32.xlu0 %v726, 112
      %v748 = vpop.permute.xlu0 %747
      %749 = vrot.lane.b32.xlu0 %v727, 112
      %v750 = vpop.permute.xlu0 %749
      %751 = vrot.lane.b32.xlu0 %v728, 112
      %v752 = vpop.permute.xlu0 %751
      %753 = vrot.lane.b32.xlu0 %v729, 112
      %v754 = vpop.permute.xlu0 %753
      %755 = vrot.lane.b32.xlu0 %v730, 112
      %v756 = vpop.permute.xlu0 %755
      %757 = vrot.lane.b32.xlu0 %v731, 112
      %v758 = vpop.permute.xlu0 %757
      %v759 = vsel %vm421, %v742, %v744
      %v760 = vsel %vm421, %v744, %v746
      %v761 = vsel %vm421, %v748, %v750
      %v762 = vsel %vm421, %v750, %v752
      %v763 = vsel %vm421, %v754, %v756
      %v764 = vsel %vm421, %v756, %v758
      %v777 = vsel %vm421, %v746, %v742
      %v778 = vsel %vm421, %v752, %v748
      %v779 = vsel %vm421, %v758, %v754
      %v780 = vmax.f32 %v723, %v759
      %v781 = vmax.f32 %v724, %v760
      %v782 = vmax.f32 %v725, %v777
      %v783 = vmax.f32 %v726, %v761
      %v784 = vmax.f32 %v727, %v762
      %v785 = vmax.f32 %v728, %v778
      %v786 = vmax.f32 %v729, %v763
      %v787 = vmax.f32 %v730, %v764
      %v788 = vmax.f32 %v731, %v779
      %v798 = vrot.slane %v780, 2
      %v799 = vrot.slane %v783, 2
      %v800 = vsel %vm358, %v798, %v799
      %v801 = vrot.slane %v781, 2
      %v802 = vrot.slane %v784, 2
      %v803 = vsel %vm358, %v801, %v802
      %v804 = vrot.slane %v782, 2
      %v805 = vrot.slane %v785, 2
      %v806 = vsel %vm358, %v804, %v805
      %v807 = vrot.slane %v786, 2
      %v808 = vsel %vm358, %v799, %v807
      %v809 = vrot.slane %v787, 2
      %v810 = vsel %vm358, %v802, %v809
      %v811 = vrot.slane %v788, 2
      %v812 = vsel %vm358, %v805, %v811
      %v819 = vrot.slane %v780, 4
      %v820 = vrot.slane %v783, 4
      %v821 = vsel %vm392, %v819, %v820
      %v822 = vrot.slane %v781, 4
      %v823 = vrot.slane %v784, 4
      %v824 = vsel %vm392, %v822, %v823
      %v825 = vrot.slane %v782, 4
      %v826 = vrot.slane %v785, 4
      %v827 = vsel %vm392, %v825, %v826
      %v828 = vrot.slane %v786, 4
      %v829 = vsel %vm392, %v820, %v828
      %v830 = vrot.slane %v787, 4
      %v831 = vsel %vm392, %v823, %v830
      %v832 = vrot.slane %v788, 4
      %v833 = vsel %vm392, %v826, %v832
      %vm840 = vcmask 1041408
      %v841 = vrot.slane %v780, 6
      %v842 = vrot.slane %v783, 6
      %v843 = vsel %vm840, %v841, %v842
      %v844 = vrot.slane %v781, 6
      %v845 = vrot.slane %v784, 6
      %v846 = vsel %vm840, %v844, %v845
      %v847 = vrot.slane %v782, 6
      %v848 = vrot.slane %v785, 6
      %v849 = vsel %vm840, %v847, %v848
      %v850 = vrot.slane %v786, 6
      %v851 = vsel %vm840, %v842, %v850
      %v852 = vrot.slane %v787, 6
      %v853 = vsel %vm840, %v845, %v852
      %v854 = vrot.slane %v788, 6
      %v855 = vsel %vm840, %v848, %v854
      %v862 = vld [vmem:[%s3] sm:$0xff]
      %v863 = vld [vmem:[%s3 + $0x8] sm:$0xff]
      %v864 = vld [vmem:[%s3 + $0x10] sm:$0xff]
      %v865 = vld [vmem:[%s3 + $0x18] sm:$0xff]
      %v866 = vld [vmem:[%s3 + $0x20] sm:$0xff]
      %v867 = vld [vmem:[%s3 + $0x28] sm:$0xff]
      %v868 = vld [vmem:[%s3 + $0x30] sm:$0xff]
      %v869 = vld [vmem:[%s3 + $0x38] sm:$0xff]
      %v870 = vld [vmem:[%s3 + $0x40] sm:$0xff]
      %v871 = vld [vmem:[%s3 + $0x48] sm:$0xff]
      %v872 = vld [vmem:[%s3 + $0x50] sm:$0xff]
      %v873 = vld [vmem:[%s3 + $0x58] sm:$0xff]
      %v874 = vld [vmem:[%s3 + $0x60] sm:$0xff]
      %v875 = vld [vmem:[%s3 + $0x68] sm:$0xff]
      %v876 = vld [vmem:[%s3 + $0x70] sm:$0xff]
      %v877 = vld [vmem:[%s3 + $0x78] sm:$0xff]
      %v878 = vld [vmem:[%s3 + $0x80] sm:$0xff]
      %v879 = vld [vmem:[%s3 + $0x88] sm:$0xff]
      %v880 = vld [vmem:[%s3 + $0x90] sm:$0xff]
      %v881 = vld [vmem:[%s3 + $0x98] sm:$0xff]
      %v882 = vld [vmem:[%s3 + $0xa0] sm:$0xff]
      %v883 = vld [vmem:[%s3 + $0xa8] sm:$0xff]
      %v884 = vld [vmem:[%s3 + $0xb0] sm:$0xff]
      %v885 = vld [vmem:[%s3 + $0xb8] sm:$0xff]
      %v886 = vld [vmem:[%s3 + $0xc0] sm:$0xff]
      %v887 = vld [vmem:[%s3 + $0xc8] sm:$0xff]
      %v888 = vld [vmem:[%s3 + $0xd0] sm:$0xff]
      %v889 = vld [vmem:[%s3 + $0xd8] sm:$0xff]
      %v890 = vld [vmem:[%s3 + $0xe0] sm:$0xff]
      %v891 = vld [vmem:[%s3 + $0xe8] sm:$0xff]
      %v892 = vld [vmem:[%s3 + $0xf0] sm:$0xff]
      %v893 = vld [vmem:[%s3 + $0xf8] sm:$0xff]
      %v894 = vld [vmem:[%s3 + $0x100] sm:$0xff]
      %v895 = vld [vmem:[%s3 + $0x108] sm:$0xff]
      %v896 = vld [vmem:[%s3 + $0x110] sm:$0xff]
      %v897 = vld [vmem:[%s3 + $0x118] sm:$0xff]
      %v898 = vld [vmem:[%s3 + $0x120] sm:$0xff]
      %v899 = vld [vmem:[%s3 + $0x128] sm:$0xff]
      %v900 = vld [vmem:[%s3 + $0x130] sm:$0xff]
      %v901 = vld [vmem:[%s3 + $0x138] sm:$0xff]
      %v902 = vld [vmem:[%s3 + $0x140] sm:$0xff]
      %v903 = vld [vmem:[%s3 + $0x148] sm:$0xff]
      %v904 = vld [vmem:[%s3 + $0x150] sm:$0xff]
      %v905 = vld [vmem:[%s3 + $0x158] sm:$0xff]
      %v906 = vld [vmem:[%s3 + $0x160] sm:$0xff]
      %v907 = vld [vmem:[%s3 + $0x168] sm:$0xff]
      %v908 = vld [vmem:[%s3 + $0x170] sm:$0xff]
      %v909 = vld [vmem:[%s3 + $0x178] sm:$0xff]
      %v910 = vld [vmem:[%s3 + $0x180] sm:$0xff]
      %v911 = vld [vmem:[%s3 + $0x188] sm:$0xff]
      %v912 = vld [vmem:[%s3 + $0x190] sm:$0xff]
      %v913 = vld [vmem:[%s3 + $0x198] sm:$0xff]
      %v914 = vld [vmem:[%s3 + $0x1a0] sm:$0xff]
      %v915 = vld [vmem:[%s3 + $0x1a8] sm:$0xff]
      %v916 = vld [vmem:[%s3 + $0x1b0] sm:$0xff]
      %v917 = vld [vmem:[%s3 + $0x1b8] sm:$0xff]
      %v918 = vld [vmem:[%s3 + $0x1c0] sm:$0xff]
      %v919 = vld [vmem:[%s3 + $0x1c8] sm:$0xff]
      %v920 = vld [vmem:[%s3 + $0x1d0] sm:$0xff]
      %v921 = vld [vmem:[%s3 + $0x1d8] sm:$0xff]
      %v922 = vld [vmem:[%s3 + $0x1e0] sm:$0xff]
      %v923 = vld [vmem:[%s3 + $0x1e8] sm:$0xff]
      %v924 = vld [vmem:[%s3 + $0x1f0] sm:$0xff]
      %v925 = vld [vmem:[%s3 + $0x1f8] sm:$0xff]
      %v926 = vld [vmem:[%s3 + $0x200] sm:$0xff]
      %v927 = vld [vmem:[%s3 + $0x208] sm:$0xff]
      %v928 = vld [vmem:[%s3 + $0x210] sm:$0xff]
      %v929 = vld [vmem:[%s3 + $0x218] sm:$0xff]
      %v930 = vld [vmem:[%s3 + $0x220] sm:$0xff]
      %v931 = vld [vmem:[%s3 + $0x228] sm:$0xff]
      %v932 = vld [vmem:[%s3 + $0x230] sm:$0xff]
      %v933 = vld [vmem:[%s3 + $0x238] sm:$0xff]
      %v934 = vld [vmem:[%s3 + $0x240] sm:$0xff]
      %v935 = vld [vmem:[%s3 + $0x248] sm:$0xff]
      %v936 = vld [vmem:[%s3 + $0x250] sm:$0xff]
      %v937 = vld [vmem:[%s3 + $0x258] sm:$0xff]
      %v938 = vld [vmem:[%s3 + $0x260] sm:$0xff]
      %v939 = vld [vmem:[%s3 + $0x268] sm:$0xff]
      %v940 = vld [vmem:[%s3 + $0x270] sm:$0xff]
      %v941 = vld [vmem:[%s3 + $0x278] sm:$0xff]
      %v942 = vld [vmem:[%s3 + $0x280] sm:$0xff]
      %v943 = vld [vmem:[%s3 + $0x288] sm:$0xff]
      %v944 = vld [vmem:[%s3 + $0x290] sm:$0xff]
      %v945 = vld [vmem:[%s3 + $0x298] sm:$0xff]
      %v946 = vld [vmem:[%s3 + $0x2a0] sm:$0xff]
      %v947 = vld [vmem:[%s3 + $0x2a8] sm:$0xff]
      %v948 = vld [vmem:[%s3 + $0x2b0] sm:$0xff]
      %v949 = vld [vmem:[%s3 + $0x2b8] sm:$0xff]
      %v950 = vld [vmem:[%s3 + $0x2c0] sm:$0xff]
      %v951 = vld [vmem:[%s3 + $0x2c8] sm:$0xff]
      %v952 = vld [vmem:[%s3 + $0x2d0] sm:$0xff]
      %v953 = vld [vmem:[%s3 + $0x2d8] sm:$0xff]
      %v954 = vld [vmem:[%s3 + $0x2e0] sm:$0xff]
      %v955 = vld [vmem:[%s3 + $0x2e8] sm:$0xff]
      %v956 = vld [vmem:[%s3 + $0x2f0] sm:$0xff]
      %v957 = vld [vmem:[%s3 + $0x2f8] sm:$0xff]
      %v958 = vld [vmem:[%s3 + $0x300] sm:$0xff]
      %v959 = vld [vmem:[%s3 + $0x308] sm:$0xff]
      %v960 = vld [vmem:[%s3 + $0x310] sm:$0xff]
      %v961 = vld [vmem:[%s3 + $0x318] sm:$0xff]
      %v962 = vld [vmem:[%s3 + $0x320] sm:$0xff]
      %v963 = vld [vmem:[%s3 + $0x328] sm:$0xff]
      %v964 = vld [vmem:[%s3 + $0x330] sm:$0xff]
      %v965 = vld [vmem:[%s3 + $0x338] sm:$0xff]
      %v966 = vld [vmem:[%s3 + $0x340] sm:$0xff]
      %v967 = vld [vmem:[%s3 + $0x348] sm:$0xff]
      %v968 = vld [vmem:[%s3 + $0x350] sm:$0xff]
      %v969 = vld [vmem:[%s3 + $0x358] sm:$0xff]
      %v970 = vld [vmem:[%s3 + $0x360] sm:$0xff]
      %v971 = vld [vmem:[%s3 + $0x368] sm:$0xff]
      %v972 = vld [vmem:[%s3 + $0x370] sm:$0xff]
      %v973 = vld [vmem:[%s3 + $0x378] sm:$0xff]
      %v974 = vld [vmem:[%s3 + $0x380] sm:$0xff]
      %v975 = vld [vmem:[%s3 + $0x388] sm:$0xff]
      %v976 = vld [vmem:[%s3 + $0x390] sm:$0xff]
      %v977 = vld [vmem:[%s3 + $0x398] sm:$0xff]
      %v978 = vld [vmem:[%s3 + $0x3a0] sm:$0xff]
      %v979 = vld [vmem:[%s3 + $0x3a8] sm:$0xff]
      %v980 = vld [vmem:[%s3 + $0x3b0] sm:$0xff]
      %v981 = vld [vmem:[%s3 + $0x3b8] sm:$0xff]
      %v982 = vld [vmem:[%s3 + $0x3c0] sm:$0xff]
      %v983 = vld [vmem:[%s3 + $0x3c8] sm:$0xff]
      %v984 = vld [vmem:[%s3 + $0x3d0] sm:$0xff]
      %v985 = vld [vmem:[%s3 + $0x3d8] sm:$0xff]
      %v986 = vld [vmem:[%s3 + $0x3e0] sm:$0xff]
      %v987 = vld [vmem:[%s3 + $0x3e8] sm:$0xff]
      %v988 = vld [vmem:[%s3 + $0x3f0] sm:$0xff]
      %v989 = vld [vmem:[%s3 + $0x3f8] sm:$0xff]
      %v990 = vld [vmem:[%s3 + $0x400] sm:$0xff]
      %v991 = vld [vmem:[%s3 + $0x408] sm:$0xff]
      %v992 = vld [vmem:[%s3 + $0x410] sm:$0xff]
      %v993 = vld [vmem:[%s3 + $0x418] sm:$0xff]
      %v994 = vld [vmem:[%s3 + $0x420] sm:$0xff]
      %v995 = vld [vmem:[%s3 + $0x428] sm:$0xff]
      %v996 = vld [vmem:[%s3 + $0x430] sm:$0xff]
      %v997 = vld [vmem:[%s3 + $0x438] sm:$0xff]
      %v998 = vld [vmem:[%s3 + $0x440] sm:$0xff]
      %v999 = vld [vmem:[%s3 + $0x448] sm:$0xff]
      %v1000 = vld [vmem:[%s3 + $0x450] sm:$0xff]
      %v1001 = vld [vmem:[%s3 + $0x458] sm:$0xff]
      %v1002 = vld [vmem:[%s3 + $0x460] sm:$0xff]
      %v1003 = vld [vmem:[%s3 + $0x468] sm:$0xff]
      %v1004 = vld [vmem:[%s3 + $0x470] sm:$0xff]
      %v1005 = vld [vmem:[%s3 + $0x478] sm:$0xff]
      %v1006 = vld [vmem:[%s3 + $0x480] sm:$0xff]
      %v1007 = vld [vmem:[%s3 + $0x488] sm:$0xff]
      %v1008 = vld [vmem:[%s3 + $0x490] sm:$0xff]
      %v1009 = vld [vmem:[%s3 + $0x498] sm:$0xff]
      %v1010 = vld [vmem:[%s3 + $0x4a0] sm:$0xff]
      %v1011 = vld [vmem:[%s3 + $0x4a8] sm:$0xff]
      %v1012 = vld [vmem:[%s3 + $0x4b0] sm:$0xff]
      %v1013 = vld [vmem:[%s3 + $0x4b8] sm:$0xff]
      %v1014 = vld [vmem:[%s3 + $0x4c0] sm:$0xff]
      %v1015 = vld [vmem:[%s3 + $0x4c8] sm:$0xff]
      %v1016 = vld [vmem:[%s3 + $0x4d0] sm:$0xff]
      %v1017 = vld [vmem:[%s3 + $0x4d8] sm:$0xff]
      %v1018 = vld [vmem:[%s3 + $0x4e0] sm:$0xff]
      %v1019 = vld [vmem:[%s3 + $0x4e8] sm:$0xff]
      %v1020 = vld [vmem:[%s3 + $0x4f0] sm:$0xff]
      %v1021 = vld [vmem:[%s3 + $0x4f8] sm:$0xff]
      %v1022 = vld [vmem:[%s3 + $0x500] sm:$0xff]
      %v1023 = vld [vmem:[%s3 + $0x508] sm:$0xff]
      %v1024 = vld [vmem:[%s3 + $0x510] sm:$0xff]
      %v1025 = vld [vmem:[%s3 + $0x518] sm:$0xff]
      %v1026 = vld [vmem:[%s3 + $0x520] sm:$0xff]
      %v1027 = vld [vmem:[%s3 + $0x528] sm:$0xff]
      %v1028 = vld [vmem:[%s3 + $0x530] sm:$0xff]
      %v1029 = vld [vmem:[%s3 + $0x538] sm:$0xff]
      %v1030 = vld [vmem:[%s3 + $0x540] sm:$0xff]
      %v1031 = vld [vmem:[%s3 + $0x548] sm:$0xff]
      %v1032 = vld [vmem:[%s3 + $0x550] sm:$0xff]
      %v1033 = vld [vmem:[%s3 + $0x558] sm:$0xff]
      %v1034 = vld [vmem:[%s3 + $0x560] sm:$0xff]
      %v1035 = vld [vmem:[%s3 + $0x568] sm:$0xff]
      %v1036 = vld [vmem:[%s3 + $0x570] sm:$0xff]
      %v1037 = vld [vmem:[%s3 + $0x578] sm:$0xff]
      %v1038 = vld [vmem:[%s3 + $0x580] sm:$0xff]
      %v1039 = vld [vmem:[%s3 + $0x588] sm:$0xff]
      %v1040 = vld [vmem:[%s3 + $0x590] sm:$0xff]
      %v1041 = vld [vmem:[%s3 + $0x598] sm:$0xff]
      %v1042 = vld [vmem:[%s3 + $0x5a0] sm:$0xff]
      %v1043 = vld [vmem:[%s3 + $0x5a8] sm:$0xff]
      %v1044 = vld [vmem:[%s3 + $0x5b0] sm:$0xff]
      %v1045 = vld [vmem:[%s3 + $0x5b8] sm:$0xff]
      %v1046 = vld [vmem:[%s3 + $0x5c0] sm:$0xff]
      %v1047 = vld [vmem:[%s3 + $0x5c8] sm:$0xff]
      %v1048 = vld [vmem:[%s3 + $0x5d0] sm:$0xff]
      %v1049 = vld [vmem:[%s3 + $0x5d8] sm:$0xff]
      %v1050 = vld [vmem:[%s3 + $0x5e0] sm:$0xff]
      %v1051 = vld [vmem:[%s3 + $0x5e8] sm:$0xff]
      %v1052 = vld [vmem:[%s3 + $0x5f0] sm:$0xff]
      %v1053 = vld [vmem:[%s3 + $0x5f8] sm:$0xff]
      %v1054 = vld [vmem:[%s3 + $0x600] sm:$0xff]
      %v1055 = vld [vmem:[%s3 + $0x608] sm:$0xff]
      %v1056 = vld [vmem:[%s3 + $0x610] sm:$0xff]
      %v1057 = vld [vmem:[%s3 + $0x618] sm:$0xff]
      %v1058 = vld [vmem:[%s3 + $0x620] sm:$0xff]
      %v1059 = vld [vmem:[%s3 + $0x628] sm:$0xff]
      %v1060 = vld [vmem:[%s3 + $0x630] sm:$0xff]
      %v1061 = vld [vmem:[%s3 + $0x638] sm:$0xff]
      %v1062 = vld [vmem:[%s3 + $0x640] sm:$0xff]
      %v1063 = vld [vmem:[%s3 + $0x648] sm:$0xff]
      %v1064 = vld [vmem:[%s3 + $0x650] sm:$0xff]
      %v1065 = vld [vmem:[%s3 + $0x658] sm:$0xff]
      %v1066 = vld [vmem:[%s3 + $0x660] sm:$0xff]
      %v1067 = vld [vmem:[%s3 + $0x668] sm:$0xff]
      %v1068 = vld [vmem:[%s3 + $0x670] sm:$0xff]
      %v1069 = vld [vmem:[%s3 + $0x678] sm:$0xff]
      %v1070 = vld [vmem:[%s3 + $0x680] sm:$0xff]
      %v1071 = vld [vmem:[%s3 + $0x688] sm:$0xff]
      %v1072 = vld [vmem:[%s3 + $0x690] sm:$0xff]
      %v1073 = vld [vmem:[%s3 + $0x698] sm:$0xff]
      %v1074 = vld [vmem:[%s3 + $0x6a0] sm:$0xff]
      %v1075 = vld [vmem:[%s3 + $0x6a8] sm:$0xff]
      %v1076 = vld [vmem:[%s3 + $0x6b0] sm:$0xff]
      %v1077 = vld [vmem:[%s3 + $0x6b8] sm:$0xff]
      %v1078 = vld [vmem:[%s3 + $0x6c0] sm:$0xff]
      %v1079 = vld [vmem:[%s3 + $0x6c8] sm:$0xff]
      %v1080 = vld [vmem:[%s3 + $0x6d0] sm:$0xff]
      %v1081 = vld [vmem:[%s3 + $0x6d8] sm:$0xff]
      %v1082 = vld [vmem:[%s3 + $0x6e0] sm:$0xff]
      %v1083 = vld [vmem:[%s3 + $0x6e8] sm:$0xff]
      %v1084 = vld [vmem:[%s3 + $0x6f0] sm:$0xff]
      %v1085 = vld [vmem:[%s3 + $0x6f8] sm:$0xff]
      %v1086 = vld [vmem:[%s3 + $0x700] sm:$0xff]
      %v1087 = vld [vmem:[%s3 + $0x708] sm:$0xff]
      %v1088 = vld [vmem:[%s3 + $0x710] sm:$0xff]
      %v1089 = vld [vmem:[%s3 + $0x718] sm:$0xff]
      %v1090 = vld [vmem:[%s3 + $0x720] sm:$0xff]
      %v1091 = vld [vmem:[%s3 + $0x728] sm:$0xff]
      %v1092 = vld [vmem:[%s3 + $0x730] sm:$0xff]
      %v1093 = vld [vmem:[%s3 + $0x738] sm:$0xff]
      %v1094 = vld [vmem:[%s3 + $0x740] sm:$0xff]
      %v1095 = vld [vmem:[%s3 + $0x748] sm:$0xff]
      %v1096 = vld [vmem:[%s3 + $0x750] sm:$0xff]
      %v1097 = vld [vmem:[%s3 + $0x758] sm:$0xff]
      %v1098 = vld [vmem:[%s3 + $0x760] sm:$0xff]
      %v1099 = vld [vmem:[%s3 + $0x768] sm:$0xff]
      %v1100 = vld [vmem:[%s3 + $0x770] sm:$0xff]
      %v1101 = vld [vmem:[%s3 + $0x778] sm:$0xff]
      %v1102 = vld [vmem:[%s4] sm:$0x1]
      %v1104 = vlaneseq
      %v1105 = vshrl.u32 %v1104, 7
      %v1106 = vsub.s32 0, %v1105
      %v1107 = vrot.slane %v1102, %v1106
      %1109 = vmatprep.subr.mxu0 0.0
      %1110 = vmatpush1.msra.mxu0 %v862
      %1111 = vmatprep.subr.mxu0 0.0
      %1112 = vmatpush1.msra.mxu0 %v863
      %1113 = vmatprep.subr.mxu0 0.0
      %1114 = vmatpush1.msra.mxu0 %v864
      %1115 = vmatprep.subr.mxu0 0.0
      %1116 = vmatpush1.msra.mxu0 %v865
      %1117 = vmatprep.subr.mxu0 0.0
      %1118 = vmatpush1.msra.mxu0 %v866
      %1119 = vmatprep.subr.mxu0 0.0
      %1120 = vmatpush1.msra.mxu0 %v867
      %1121 = vmatprep.subr.mxu0 0.0
      %1122 = vmatpush1.msra.mxu0 %v868
      %1123 = vmatprep.subr.mxu0 0.0
      %1124 = vmatpush1.msra.mxu0 %v869
      %1125 = vmatprep.subr.mxu0 0.0
      %1126 = vmatpush1.msra.mxu0 %v870
      %1127 = vmatprep.subr.mxu0 0.0
      %1128 = vmatpush1.msra.mxu0 %v871
      %1129 = vmatprep.subr.mxu0 0.0
      %1130 = vmatpush1.msra.mxu0 %v872
      %1131 = vmatprep.subr.mxu0 0.0
      %1132 = vmatpush1.msra.mxu0 %v873
      %1133 = vmatprep.subr.mxu0 0.0
      %1134 = vmatpush1.msra.mxu0 %v874
      %1135 = vmatprep.subr.mxu0 0.0
      %1136 = vmatpush1.msra.mxu0 %v875
      %1137 = vmatprep.subr.mxu0 0.0
      %1138 = vmatpush1.msra.mxu0 %v876
      %1139 = vmatprep.subr.mxu0 0.0
      %1140 = vmatpush1.msra.mxu0 %v877
      %1141 = vmatprep.subr.mxu0 0.0
      %1142 = vmatpush1.msra.mxu0 %v878
      %1143 = vmatprep.subr.mxu0 0.0
      %1144 = vmatpush1.msra.mxu0 %v879
      %1145 = vmatprep.subr.mxu0 0.0
      %1146 = vmatpush1.msra.mxu0 %v880
      %1147 = vmatprep.subr.mxu0 0.0
      %1148 = vmatpush1.msra.mxu0 %v881
      %1149 = vmatprep.subr.mxu0 0.0
      %1150 = vmatpush1.msra.mxu0 %v882
      %1151 = vmatprep.subr.mxu0 0.0
      %1152 = vmatpush1.msra.mxu0 %v883
      %1153 = vmatprep.subr.mxu0 0.0
      %1154 = vmatpush1.msra.mxu0 %v884
      %1155 = vmatprep.subr.mxu0 0.0
      %1156 = vmatpush1.msra.mxu0 %v885
      %1157 = vmatprep.subr.mxu0 0.0
      %1158 = vmatpush1.msra.mxu0 %v886
      %1159 = vmatprep.subr.mxu0 0.0
      %1160 = vmatpush1.msra.mxu0 %v887
      %1161 = vmatprep.subr.mxu0 0.0
      %1162 = vmatpush1.msra.mxu0 %v888
      %1163 = vmatprep.subr.mxu0 0.0
      %1164 = vmatpush1.msra.mxu0 %v889
      %1165 = vmatprep.subr.mxu0 0.0
      %1166 = vmatpush1.msra.mxu0 %v890
      %1167 = vmatprep.subr.mxu0 0.0
      %1168 = vmatpush1.msra.mxu0 %v891
      %1169 = vmatprep.subr.mxu0 0.0
      %1170 = vmatpush1.msra.mxu0 %v892
      %1171 = vmatprep.subr.mxu0 0.0
      %1172 = vmatpush1.msra.mxu0 %v893
      %1173 = vmatprep.mubr.f32.mxu0 %v781
      %1174 = vmatmul.mubr.f32.gmra.mrb[0].mxu0 %v780
      %v1175 = vpop.f32.mrb[0].mxu0
      %v1176 = vadd.f32 %v1107, %v1175
      %v1177 = vpop.f32.mrb[0].mxu0
      %1178 = vmatprep.mubr.f32.mxu0 %v784
      %1179 = vmatmul.mubr.f32.gmra.mrb[0].mxu0 %v783
      %v1180 = vpop.f32.mrb[0].mxu0
      %v1181 = vadd.f32 %v1107, %v1180
      %v1182 = vpop.f32.mrb[0].mxu0
      %1183 = vdwg.mxu0
      %1184 = vmatprep.subr.mxu0 0.0
      %1185 = vmatpush1.msra.mxu0 %v894
      %1186 = vmatprep.subr.mxu0 0.0
      %1187 = vmatpush1.msra.mxu0 %v895
      %1188 = vmatprep.subr.mxu0 0.0
      %1189 = vmatpush1.msra.mxu0 %v896
      %1190 = vmatprep.subr.mxu0 0.0
      %1191 = vmatpush1.msra.mxu0 %v897
      %1192 = vmatprep.subr.mxu0 0.0
      %1193 = vmatpush1.msra.mxu0 %v898
      %1194 = vmatprep.subr.mxu0 0.0
      %1195 = vmatpush1.msra.mxu0 %v899
      %1196 = vmatprep.subr.mxu0 0.0
      %1197 = vmatpush1.msra.mxu0 %v900
      %1198 = vmatprep.subr.mxu0 0.0
      %1199 = vmatpush1.msra.mxu0 %v901
      %1200 = vmatprep.subr.mxu0 0.0
      %1201 = vmatpush1.msra.mxu0 %v902
      %1202 = vmatprep.subr.mxu0 0.0
      %1203 = vmatpush1.msra.mxu0 %v903
      %1204 = vmatprep.subr.mxu0 0.0
      %1205 = vmatpush1.msra.mxu0 %v904
      %1206 = vmatprep.subr.mxu0 0.0
      %1207 = vmatpush1.msra.mxu0 %v905
      %1208 = vmatprep.subr.mxu0 0.0
      %1209 = vmatpush1.msra.mxu0 %v906
      %1210 = vmatprep.subr.mxu0 0.0
      %1211 = vmatpush1.msra.mxu0 %v907
      %1212 = vmatprep.subr.mxu0 0.0
      %1213 = vmatpush1.msra.mxu0 %v908
      %1214 = vmatprep.subr.mxu0 0.0
      %1215 = vmatpush1.msra.mxu0 %v909
      %1216 = vmatprep.subr.mxu0 0.0
      %1217 = vmatpush1.msra.mxu0 %v910
      %1218 = vmatprep.subr.mxu0 0.0
      %1219 = vmatpush1.msra.mxu0 %v911
      %1220 = vmatprep.subr.mxu0 0.0
      %1221 = vmatpush1.msra.mxu0 %v912
      %1222 = vmatprep.subr.mxu0 0.0
      %1223 = vmatpush1.msra.mxu0 %v913
      %1224 = vmatprep.subr.mxu0 0.0
      %1225 = vmatpush1.msra.mxu0 %v914
      %1226 = vmatprep.subr.mxu0 0.0
      %1227 = vmatpush1.msra.mxu0 %v915
      %1228 = vmatprep.subr.mxu0 0.0
      %1229 = vmatpush1.msra.mxu0 %v916
      %1230 = vmatprep.subr.mxu0 0.0
      %1231 = vmatpush1.msra.mxu0 %v917
      %1232 = vmatprep.subr.mxu0 0.0
      %1233 = vmatpush1.msra.mxu0 %v918
      %1234 = vmatprep.subr.mxu0 0.0
      %1235 = vmatpush1.msra.mxu0 %v919
      %1236 = vmatprep.subr.mxu0 0.0
      %1237 = vmatpush1.msra.mxu0 %v920
      %1238 = vmatprep.subr.mxu0 0.0
      %1239 = vmatpush1.msra.mxu0 %v921
      %1240 = vmatprep.subr.mxu0 0.0
      %1241 = vmatpush1.msra.mxu0 %v922
      %1242 = vmatprep.subr.mxu0 0.0
      %1243 = vmatpush1.msra.mxu0 %v923
      %1244 = vmatprep.subr.mxu0 0.0
      %1245 = vmatpush1.msra.mxu0 %v924
      %1246 = vmatprep.subr.mxu0 0.0
      %1247 = vmatpush1.msra.mxu0 %v925
      %1248 = vmatprep.mubr.f32.mxu0 %v800
      %1249 = vmatmul.mubr.f32.gmra.mrb[0].mxu0 %v782
      %v1250 = vpop.f32.mrb[0].mxu0
      %v1251 = vadd.f32 %v1176, %v1250
      %v1252 = vpop.f32.mrb[0].mxu0
      %1253 = vmatprep.mubr.f32.mxu0 %v808
      %1254 = vmatmul.mubr.f32.gmra.mrb[0].mxu0 %v785
      %v1255 = vpop.f32.mrb[0].mxu0
      %v1256 = vadd.f32 %v1181, %v1255
      %v1257 = vpop.f32.mrb[0].mxu0
      %1258 = vdwg.mxu0
      %1259 = vmatprep.subr.mxu0 0.0
      %1260 = vmatpush1.msra.mxu0 %v926
      %1261 = vmatprep.subr.mxu0 0.0
      %1262 = vmatpush1.msra.mxu0 %v927
      %1263 = vmatprep.subr.mxu0 0.0
      %1264 = vmatpush1.msra.mxu0 %v928
      %1265 = vmatprep.subr.mxu0 0.0
      %1266 = vmatpush1.msra.mxu0 %v929
      %1267 = vmatprep.subr.mxu0 0.0
      %1268 = vmatpush1.msra.mxu0 %v930
      %1269 = vmatprep.subr.mxu0 0.0
      %1270 = vmatpush1.msra.mxu0 %v931
      %1271 = vmatprep.subr.mxu0 0.0
      %1272 = vmatpush1.msra.mxu0 %v932
      %1273 = vmatprep.subr.mxu0 0.0
      %1274 = vmatpush1.msra.mxu0 %v933
      %1275 = vmatprep.subr.mxu0 0.0
      %1276 = vmatpush1.msra.mxu0 %v934
      %1277 = vmatprep.subr.mxu0 0.0
      %1278 = vmatpush1.msra.mxu0 %v935
      %1279 = vmatprep.subr.mxu0 0.0
      %1280 = vmatpush1.msra.mxu0 %v936
      %1281 = vmatprep.subr.mxu0 0.0
      %1282 = vmatpush1.msra.mxu0 %v937
      %1283 = vmatprep.subr.mxu0 0.0
      %1284 = vmatpush1.msra.mxu0 %v938
      %1285 = vmatprep.subr.mxu0 0.0
      %1286 = vmatpush1.msra.mxu0 %v939
      %1287 = vmatprep.subr.mxu0 0.0
      %1288 = vmatpush1.msra.mxu0 %v940
      %1289 = vmatprep.subr.mxu0 0.0
      %1290 = vmatpush1.msra.mxu0 %v941
      %1291 = vmatprep.subr.mxu0 0.0
      %1292 = vmatpush1.msra.mxu0 %v942
      %1293 = vmatprep.subr.mxu0 0.0
      %1294 = vmatpush1.msra.mxu0 %v943
      %1295 = vmatprep.subr.mxu0 0.0
      %1296 = vmatpush1.msra.mxu0 %v944
      %1297 = vmatprep.subr.mxu0 0.0
      %1298 = vmatpush1.msra.mxu0 %v945
      %1299 = vmatprep.subr.mxu0 0.0
      %1300 = vmatpush1.msra.mxu0 %v946
      %1301 = vmatprep.subr.mxu0 0.0
      %1302 = vmatpush1.msra.mxu0 %v947
      %1303 = vmatprep.subr.mxu0 0.0
      %1304 = vmatpush1.msra.mxu0 %v948
      %1305 = vmatprep.subr.mxu0 0.0
      %1306 = vmatpush1.msra.mxu0 %v949
      %1307 = vmatprep.subr.mxu0 0.0
      %1308 = vmatpush1.msra.mxu0 %v950
      %1309 = vmatprep.subr.mxu0 0.0
      %1310 = vmatpush1.msra.mxu0 %v951
      %1311 = vmatprep.subr.mxu0 0.0
      %1312 = vmatpush1.msra.mxu0 %v952
      %1313 = vmatprep.subr.mxu0 0.0
      %1314 = vmatpush1.msra.mxu0 %v953
      %1315 = vmatprep.subr.mxu0 0.0
      %1316 = vmatpush1.msra.mxu0 %v954
      %1317 = vmatprep.subr.mxu0 0.0
      %1318 = vmatpush1.msra.mxu0 %v955
      %1319 = vmatprep.subr.mxu0 0.0
      %1320 = vmatpush1.msra.mxu0 %v956
      %1321 = vmatprep.subr.mxu0 0.0
      %1322 = vmatpush1.msra.mxu0 %v957
      %1323 = vmatprep.mubr.f32.mxu0 %v806
      %1324 = vmatmul.mubr.f32.gmra.mrb[0].mxu0 %v803
      %v1325 = vpop.f32.mrb[0].mxu0
      %v1326 = vadd.f32 %v1251, %v1325
      %v1327 = vpop.f32.mrb[0].mxu0
      %1328 = vmatprep.mubr.f32.mxu0 %v812
      %1329 = vmatmul.mubr.f32.gmra.mrb[0].mxu0 %v810
      %v1330 = vpop.f32.mrb[0].mxu0
      %v1331 = vadd.f32 %v1256, %v1330
      %v1332 = vpop.f32.mrb[0].mxu0
      %1333 = vdwg.mxu0
      %1334 = vmatprep.subr.mxu0 0.0
      %1335 = vmatpush1.msra.mxu0 %v958
      %1336 = vmatprep.subr.mxu0 0.0
      %1337 = vmatpush1.msra.mxu0 %v959
      %1338 = vmatprep.subr.mxu0 0.0
      %1339 = vmatpush1.msra.mxu0 %v960
      %1340 = vmatprep.subr.mxu0 0.0
      %1341 = vmatpush1.msra.mxu0 %v961
      %1342 = vmatprep.subr.mxu0 0.0
      %1343 = vmatpush1.msra.mxu0 %v962
      %1344 = vmatprep.subr.mxu0 0.0
      %1345 = vmatpush1.msra.mxu0 %v963
      %1346 = vmatprep.subr.mxu0 0.0
      %1347 = vmatpush1.msra.mxu0 %v964
      %1348 = vmatprep.subr.mxu0 0.0
      %1349 = vmatpush1.msra.mxu0 %v965
      %1350 = vmatprep.subr.mxu0 0.0
      %1351 = vmatpush1.msra.mxu0 %v966
      %1352 = vmatprep.subr.mxu0 0.0
      %1353 = vmatpush1.msra.mxu0 %v967
      %1354 = vmatprep.subr.mxu0 0.0
      %1355 = vmatpush1.msra.mxu0 %v968
      %1356 = vmatprep.subr.mxu0 0.0
      %1357 = vmatpush1.msra.mxu0 %v969
      %1358 = vmatprep.subr.mxu0 0.0
      %1359 = vmatpush1.msra.mxu0 %v970
      %1360 = vmatprep.subr.mxu0 0.0
      %1361 = vmatpush1.msra.mxu0 %v971
      %1362 = vmatprep.subr.mxu0 0.0
      %1363 = vmatpush1.msra.mxu0 %v972
      %1364 = vmatprep.subr.mxu0 0.0
      %1365 = vmatpush1.msra.mxu0 %v973
      %1366 = vmatprep.subr.mxu0 0.0
      %1367 = vmatpush1.msra.mxu0 %v974
      %1368 = vmatprep.subr.mxu0 0.0
      %1369 = vmatpush1.msra.mxu0 %v975
      %1370 = vmatprep.subr.mxu0 0.0
      %1371 = vmatpush1.msra.mxu0 %v976
      %1372 = vmatprep.subr.mxu0 0.0
      %1373 = vmatpush1.msra.mxu0 %v977
      %1374 = vmatprep.subr.mxu0 0.0
      %1375 = vmatpush1.msra.mxu0 %v978
      %1376 = vmatprep.subr.mxu0 0.0
      %1377 = vmatpush1.msra.mxu0 %v979
      %1378 = vmatprep.subr.mxu0 0.0
      %1379 = vmatpush1.msra.mxu0 %v980
      %1380 = vmatprep.subr.mxu0 0.0
      %1381 = vmatpush1.msra.mxu0 %v981
      %1382 = vmatprep.subr.mxu0 0.0
      %1383 = vmatpush1.msra.mxu0 %v982
      %1384 = vmatprep.subr.mxu0 0.0
      %1385 = vmatpush1.msra.mxu0 %v983
      %1386 = vmatprep.subr.mxu0 0.0
      %1387 = vmatpush1.msra.mxu0 %v984
      %1388 = vmatprep.subr.mxu0 0.0
      %1389 = vmatpush1.msra.mxu0 %v985
      %1390 = vmatprep.subr.mxu0 0.0
      %1391 = vmatpush1.msra.mxu0 %v986
      %1392 = vmatprep.subr.mxu0 0.0
      %1393 = vmatpush1.msra.mxu0 %v987
      %1394 = vmatprep.subr.mxu0 0.0
      %1395 = vmatpush1.msra.mxu0 %v988
      %1396 = vmatprep.subr.mxu0 0.0
      %1397 = vmatpush1.msra.mxu0 %v989
      %1398 = vmatprep.mubr.f32.mxu0 %v824
      %1399 = vmatmul.mubr.f32.gmra.mrb[0].mxu0 %v821
      %v1400 = vpop.f32.mrb[0].mxu0
      %v1401 = vadd.f32 %v1326, %v1400
      %v1402 = vpop.f32.mrb[0].mxu0
      %1403 = vmatprep.mubr.f32.mxu0 %v831
      %1404 = vmatmul.mubr.f32.gmra.mrb[0].mxu0 %v829
      %v1405 = vpop.f32.mrb[0].mxu0
      %v1406 = vadd.f32 %v1331, %v1405
      %v1407 = vpop.f32.mrb[0].mxu0
      %1408 = vdwg.mxu0
      %1409 = vmatprep.subr.mxu0 0.0
      %1410 = vmatpush1.msra.mxu0 %v990
      %1411 = vmatprep.subr.mxu0 0.0
      %1412 = vmatpush1.msra.mxu0 %v991
      %1413 = vmatprep.subr.mxu0 0.0
      %1414 = vmatpush1.msra.mxu0 %v992
      %1415 = vmatprep.subr.mxu0 0.0
      %1416 = vmatpush1.msra.mxu0 %v993
      %1417 = vmatprep.subr.mxu0 0.0
      %1418 = vmatpush1.msra.mxu0 %v994
      %1419 = vmatprep.subr.mxu0 0.0
      %1420 = vmatpush1.msra.mxu0 %v995
      %1421 = vmatprep.subr.mxu0 0.0
      %1422 = vmatpush1.msra.mxu0 %v996
      %1423 = vmatprep.subr.mxu0 0.0
      %1424 = vmatpush1.msra.mxu0 %v997
      %1425 = vmatprep.subr.mxu0 0.0
      %1426 = vmatpush1.msra.mxu0 %v998
      %1427 = vmatprep.subr.mxu0 0.0
      %1428 = vmatpush1.msra.mxu0 %v999
      %1429 = vmatprep.subr.mxu0 0.0
      %1430 = vmatpush1.msra.mxu0 %v1000
      %1431 = vmatprep.subr.mxu0 0.0
      %1432 = vmatpush1.msra.mxu0 %v1001
      %1433 = vmatprep.subr.mxu0 0.0
      %1434 = vmatpush1.msra.mxu0 %v1002
      %1435 = vmatprep.subr.mxu0 0.0
      %1436 = vmatpush1.msra.mxu0 %v1003
      %1437 = vmatprep.subr.mxu0 0.0
      %1438 = vmatpush1.msra.mxu0 %v1004
      %1439 = vmatprep.subr.mxu0 0.0
      %1440 = vmatpush1.msra.mxu0 %v1005
      %1441 = vmatprep.subr.mxu0 0.0
      %1442 = vmatpush1.msra.mxu0 %v1006
      %1443 = vmatprep.subr.mxu0 0.0
      %1444 = vmatpush1.msra.mxu0 %v1007
      %1445 = vmatprep.subr.mxu0 0.0
      %1446 = vmatpush1.msra.mxu0 %v1008
      %1447 = vmatprep.subr.mxu0 0.0
      %1448 = vmatpush1.msra.mxu0 %v1009
      %1449 = vmatprep.subr.mxu0 0.0
      %1450 = vmatpush1.msra.mxu0 %v1010
      %1451 = vmatprep.subr.mxu0 0.0
      %1452 = vmatpush1.msra.mxu0 %v1011
      %1453 = vmatprep.subr.mxu0 0.0
      %1454 = vmatpush1.msra.mxu0 %v1012
      %1455 = vmatprep.subr.mxu0 0.0
      %1456 = vmatpush1.msra.mxu0 %v1013
      %1457 = vmatprep.subr.mxu0 0.0
      %1458 = vmatpush1.msra.mxu0 %v1014
      %1459 = vmatprep.subr.mxu0 0.0
      %1460 = vmatpush1.msra.mxu0 %v1015
      %1461 = vmatprep.subr.mxu0 0.0
      %1462 = vmatpush1.msra.mxu0 %v1016
      %1463 = vmatprep.subr.mxu0 0.0
      %1464 = vmatpush1.msra.mxu0 %v1017
      %1465 = vmatprep.subr.mxu0 0.0
      %1466 = vmatpush1.msra.mxu0 %v1018
      %1467 = vmatprep.subr.mxu0 0.0
      %1468 = vmatpush1.msra.mxu0 %v1019
      %1469 = vmatprep.subr.mxu0 0.0
      %1470 = vmatpush1.msra.mxu0 %v1020
      %1471 = vmatprep.subr.mxu0 0.0
      %1472 = vmatpush1.msra.mxu0 %v1021
      %1473 = vmatprep.mubr.f32.mxu0 %v843
      %1474 = vmatmul.mubr.f32.gmra.mrb[0].mxu0 %v827
      %v1475 = vpop.f32.mrb[0].mxu0
      %v1476 = vadd.f32 %v1401, %v1475
      %v1477 = vpop.f32.mrb[0].mxu0
      %1478 = vmatprep.mubr.f32.mxu0 %v851
      %1479 = vmatmul.mubr.f32.gmra.mrb[0].mxu0 %v833
      %v1480 = vpop.f32.mrb[0].mxu0
      %v1481 = vadd.f32 %v1406, %v1480
      %v1482 = vpop.f32.mrb[0].mxu0
      %1483 = vdwg.mxu0
      %1484 = vmatprep.subr.mxu0 0.0
      %1485 = vmatpush1.msra.mxu0 %v1022
      %1486 = vmatprep.subr.mxu0 0.0
      %1487 = vmatpush1.msra.mxu0 %v1023
      %1488 = vmatprep.subr.mxu0 0.0
      %1489 = vmatpush1.msra.mxu0 %v1024
      %1490 = vmatprep.subr.mxu0 0.0
      %1491 = vmatpush1.msra.mxu0 %v1025
      %1492 = vmatprep.subr.mxu0 0.0
      %1493 = vmatpush1.msra.mxu0 %v1026
      %1494 = vmatprep.subr.mxu0 0.0
      %1495 = vmatpush1.msra.mxu0 %v1027
      %1496 = vmatprep.subr.mxu0 0.0
      %1497 = vmatpush1.msra.mxu0 %v1028
      %1498 = vmatprep.subr.mxu0 0.0
      %1499 = vmatpush1.msra.mxu0 %v1029
      %1500 = vmatprep.subr.mxu0 0.0
      %1501 = vmatpush1.msra.mxu0 %v1030
      %1502 = vmatprep.subr.mxu0 0.0
      %1503 = vmatpush1.msra.mxu0 %v1031
      %1504 = vmatprep.subr.mxu0 0.0
      %1505 = vmatpush1.msra.mxu0 %v1032
      %1506 = vmatprep.subr.mxu0 0.0
      %1507 = vmatpush1.msra.mxu0 %v1033
      %1508 = vmatprep.subr.mxu0 0.0
      %1509 = vmatpush1.msra.mxu0 %v1034
      %1510 = vmatprep.subr.mxu0 0.0
      %1511 = vmatpush1.msra.mxu0 %v1035
      %1512 = vmatprep.subr.mxu0 0.0
      %1513 = vmatpush1.msra.mxu0 %v1036
      %1514 = vmatprep.subr.mxu0 0.0
      %1515 = vmatpush1.msra.mxu0 %v1037
      %1516 = vmatprep.subr.mxu0 0.0
      %1517 = vmatpush1.msra.mxu0 %v1038
      %1518 = vmatprep.subr.mxu0 0.0
      %1519 = vmatpush1.msra.mxu0 %v1039
      %1520 = vmatprep.subr.mxu0 0.0
      %1521 = vmatpush1.msra.mxu0 %v1040
      %1522 = vmatprep.subr.mxu0 0.0
      %1523 = vmatpush1.msra.mxu0 %v1041
      %1524 = vmatprep.subr.mxu0 0.0
      %1525 = vmatpush1.msra.mxu0 %v1042
      %1526 = vmatprep.subr.mxu0 0.0
      %1527 = vmatpush1.msra.mxu0 %v1043
      %1528 = vmatprep.subr.mxu0 0.0
      %1529 = vmatpush1.msra.mxu0 %v1044
      %1530 = vmatprep.subr.mxu0 0.0
      %1531 = vmatpush1.msra.mxu0 %v1045
      %1532 = vmatprep.subr.mxu0 0.0
      %1533 = vmatpush1.msra.mxu0 %v1046
      %1534 = vmatprep.subr.mxu0 0.0
      %1535 = vmatpush1.msra.mxu0 %v1047
      %1536 = vmatprep.subr.mxu0 0.0
      %1537 = vmatpush1.msra.mxu0 %v1048
      %1538 = vmatprep.subr.mxu0 0.0
      %1539 = vmatpush1.msra.mxu0 %v1049
      %1540 = vmatprep.subr.mxu0 0.0
      %1541 = vmatpush1.msra.mxu0 %v1050
      %1542 = vmatprep.subr.mxu0 0.0
      %1543 = vmatpush1.msra.mxu0 %v1051
      %1544 = vmatprep.subr.mxu0 0.0
      %1545 = vmatpush1.msra.mxu0 %v1052
      %1546 = vmatprep.subr.mxu0 0.0
      %1547 = vmatpush1.msra.mxu0 %v1053
      %1548 = vmatprep.mubr.f32.mxu0 %v849
      %1549 = vmatmul.mubr.f32.gmra.mrb[0].mxu0 %v846
      %v1550 = vpop.f32.mrb[0].mxu0
      %v1551 = vadd.f32 %v1476, %v1550
      %v1552 = vpop.f32.mrb[0].mxu0
      %1553 = vmatprep.mubr.f32.mxu0 %v855
      %1554 = vmatmul.mubr.f32.gmra.mrb[0].mxu0 %v853
      %v1555 = vpop.f32.mrb[0].mxu0
      %v1556 = vadd.f32 %v1481, %v1555
      %v1557 = vpop.f32.mrb[0].mxu0
      %1558 = vdwg.mxu0
      %1559 = vmatprep.subr.mxu0 0.0
      %1560 = vmatpush1.msra.mxu0 %v1054
      %1561 = vmatprep.subr.mxu0 0.0
      %1562 = vmatpush1.msra.mxu0 %v1055
      %1563 = vmatprep.subr.mxu0 0.0
      %1564 = vmatpush1.msra.mxu0 %v1056
      %1565 = vmatprep.subr.mxu0 0.0
      %1566 = vmatpush1.msra.mxu0 %v1057
      %1567 = vmatprep.subr.mxu0 0.0
      %1568 = vmatpush1.msra.mxu0 %v1058
      %1569 = vmatprep.subr.mxu0 0.0
      %1570 = vmatpush1.msra.mxu0 %v1059
      %1571 = vmatprep.subr.mxu0 0.0
      %1572 = vmatpush1.msra.mxu0 %v1060
      %1573 = vmatprep.subr.mxu0 0.0
      %1574 = vmatpush1.msra.mxu0 %v1061
      %1575 = vmatprep.subr.mxu0 0.0
      %1576 = vmatpush1.msra.mxu0 %v1062
      %1577 = vmatprep.subr.mxu0 0.0
      %1578 = vmatpush1.msra.mxu0 %v1063
      %1579 = vmatprep.subr.mxu0 0.0
      %1580 = vmatpush1.msra.mxu0 %v1064
      %1581 = vmatprep.subr.mxu0 0.0
      %1582 = vmatpush1.msra.mxu0 %v1065
      %1583 = vmatprep.subr.mxu0 0.0
      %1584 = vmatpush1.msra.mxu0 %v1066
      %1585 = vmatprep.subr.mxu0 0.0
      %1586 = vmatpush1.msra.mxu0 %v1067
      %1587 = vmatprep.subr.mxu0 0.0
      %1588 = vmatpush1.msra.mxu0 %v1068
      %1589 = vmatprep.subr.mxu0 0.0
      %1590 = vmatpush1.msra.mxu0 %v1069
      %1591 = vmatprep.subr.mxu0 0.0
      %1592 = vmatpush1.msra.mxu0 %v1070
      %1593 = vmatprep.subr.mxu0 0.0
      %1594 = vmatpush1.msra.mxu0 %v1071
      %1595 = vmatprep.subr.mxu0 0.0
      %1596 = vmatpush1.msra.mxu0 %v1072
      %1597 = vmatprep.subr.mxu0 0.0
      %1598 = vmatpush1.msra.mxu0 %v1073
      %1599 = vmatprep.subr.mxu0 0.0
      %1600 = vmatpush1.msra.mxu0 %v1074
      %1601 = vmatprep.subr.mxu0 0.0
      %1602 = vmatpush1.msra.mxu0 %v1075
      %1603 = vmatprep.subr.mxu0 0.0
      %1604 = vmatpush1.msra.mxu0 %v1076
      %1605 = vmatprep.subr.mxu0 0.0
      %1606 = vmatpush1.msra.mxu0 %v1077
      %1607 = vmatprep.subr.mxu0 0.0
      %1608 = vmatpush1.msra.mxu0 %v1078
      %1609 = vmatprep.subr.mxu0 0.0
      %1610 = vmatpush1.msra.mxu0 %v1079
      %1611 = vmatprep.subr.mxu0 0.0
      %1612 = vmatpush1.msra.mxu0 %v1080
      %1613 = vmatprep.subr.mxu0 0.0
      %1614 = vmatpush1.msra.mxu0 %v1081
      %1615 = vmatprep.subr.mxu0 0.0
      %1616 = vmatpush1.msra.mxu0 %v1082
      %1617 = vmatprep.subr.mxu0 0.0
      %1618 = vmatpush1.msra.mxu0 %v1083
      %1619 = vmatprep.subr.mxu0 0.0
      %1620 = vmatpush1.msra.mxu0 %v1084
      %1621 = vmatprep.subr.mxu0 0.0
      %1622 = vmatpush1.msra.mxu0 %v1085
      %1623 = vmatprep.mubr.f32.mxu0 %v784
      %1624 = vmatmul.mubr.f32.gmra.mrb[0].mxu0 %v783
      %v1625 = vpop.f32.mrb[0].mxu0
      %v1626 = vadd.f32 %v1551, %v1625
      %v1627 = vpop.f32.mrb[0].mxu0
      %1628 = vmatprep.mubr.f32.mxu0 %v787
      %1629 = vmatmul.mubr.f32.gmra.mrb[0].mxu0 %v786
      %v1630 = vpop.f32.mrb[0].mxu0
      %v1631 = vadd.f32 %v1556, %v1630
      %v1632 = vpop.f32.mrb[0].mxu0
      %1633 = vdwg.mxu0
      %1634 = vmatprep.subr.mxu0 0.0
      %1635 = vmatpush1.msra.mxu0 %v1086
      %1636 = vmatprep.subr.mxu0 0.0
      %1637 = vmatpush1.msra.mxu0 %v1087
      %1638 = vmatprep.subr.mxu0 0.0
      %1639 = vmatpush1.msra.mxu0 %v1088
      %1640 = vmatprep.subr.mxu0 0.0
      %1641 = vmatpush1.msra.mxu0 %v1089
      %1642 = vmatprep.subr.mxu0 0.0
      %1643 = vmatpush1.msra.mxu0 %v1090
      %1644 = vmatprep.subr.mxu0 0.0
      %1645 = vmatpush1.msra.mxu0 %v1091
      %1646 = vmatprep.subr.mxu0 0.0
      %1647 = vmatpush1.msra.mxu0 %v1092
      %1648 = vmatprep.subr.mxu0 0.0
      %1649 = vmatpush1.msra.mxu0 %v1093
      %1650 = vmatprep.subr.mxu0 0.0
      %1651 = vmatpush1.msra.mxu0 %v1094
      %1652 = vmatprep.subr.mxu0 0.0
      %1653 = vmatpush1.msra.mxu0 %v1095
      %1654 = vmatprep.subr.mxu0 0.0
      %1655 = vmatpush1.msra.mxu0 %v1096
      %1656 = vmatprep.subr.mxu0 0.0
      %1657 = vmatpush1.msra.mxu0 %v1097
      %1658 = vmatprep.subr.mxu0 0.0
      %1659 = vmatpush1.msra.mxu0 %v1098
      %1660 = vmatprep.subr.mxu0 0.0
      %1661 = vmatpush1.msra.mxu0 %v1099
      %1662 = vmatprep.subr.mxu0 0.0
      %1663 = vmatpush1.msra.mxu0 %v1100
      %1664 = vmatprep.subr.mxu0 0.0
      %1665 = vmatpush1.msra.mxu0 %v1101
      %1666 = vmatprep.subr.mxu0 0.0
      %1667 = vmatpush1.msra.mxu0 0.0
      %1668 = vmatprep.subr.mxu0 0.0
      %1669 = vmatpush1.msra.mxu0 0.0
      %1670 = vmatprep.subr.mxu0 0.0
      %1671 = vmatpush1.msra.mxu0 0.0
      %1672 = vmatprep.subr.mxu0 0.0
      %1673 = vmatpush1.msra.mxu0 0.0
      %1674 = vmatprep.subr.mxu0 0.0
      %1675 = vmatpush1.msra.mxu0 0.0
      %1676 = vmatprep.subr.mxu0 0.0
      %1677 = vmatpush1.msra.mxu0 0.0
      %1678 = vmatprep.subr.mxu0 0.0
      %1679 = vmatpush1.msra.mxu0 0.0
      %1680 = vmatprep.subr.mxu0 0.0
      %1681 = vmatpush1.msra.mxu0 0.0
      %1682 = vmatprep.subr.mxu0 0.0
      %1683 = vmatpush1.msra.mxu0 0.0
      %1684 = vmatprep.subr.mxu0 0.0
      %1685 = vmatpush1.msra.mxu0 0.0
      %1686 = vmatprep.subr.mxu0 0.0
      %1687 = vmatpush1.msra.mxu0 0.0
      %1688 = vmatprep.subr.mxu0 0.0
      %1689 = vmatpush1.msra.mxu0 0.0
      %1690 = vmatprep.subr.mxu0 0.0
      %1691 = vmatpush1.msra.mxu0 0.0
      %1692 = vmatprep.subr.mxu0 0.0
      %1693 = vmatpush1.msra.mxu0 0.0
      %1694 = vmatprep.subr.mxu0 0.0
      %1695 = vmatpush1.msra.mxu0 0.0
      %1696 = vmatprep.subr.mxu0 0.0
      %1697 = vmatpush1.msra.mxu0 0.0
      %1698 = vmatprep.mubr.f32.mxu0 0.0
      %1699 = vmatmul.mubr.f32.gmra.mrb[0].mxu0 %v785
      %v1700 = vpop.f32.mrb[0].mxu0
      %v1701 = vadd.f32 %v1626, %v1700
      %v1702 = vpop.f32.mrb[0].mxu0
      %1703 = vmatprep.mubr.f32.mxu0 0.0
      %1704 = vmatmul.mubr.f32.gmra.mrb[0].mxu0 %v788
      %v1705 = vpop.f32.mrb[0].mxu0
      %v1706 = vadd.f32 %v1631, %v1705
      %v1707 = vpop.f32.mrb[0].mxu0
      %1708 = vdwg.mxu0
      %v1709 = vmax.f32 %v1701, 0.0
      %v1710 = vmax.f32 %v1706, 0.0
      %v1713 = vrot.slane %v1709, 2
      %v1714 = vrot.slane %v1710, 2
      %v1715 = vsel %vm358, %v1713, %v1714
      %v1719 = vsel %vm358, %v1714, %v1713
      %v1720 = vmax.f32 %v1709, %v1715
      %v1721 = vmax.f32 %v1710, %v1719
      %1724 = vrot.lane.b32.xlu0 %v1720, 112
      %v1725 = vpop.permute.xlu0 %1724
      %1726 = vrot.lane.b32.xlu0 %v1721, 112
      %v1727 = vpop.permute.xlu0 %1726
      %v1730 = vmax.f32 %v1720, %v1725
      %v1731 = vmax.f32 %v1721, %v1727
      %v1734 = vrot.slane %v1730, 4
      %v1735 = vrot.slane %v1731, 4
      %v1736 = vsel %vm392, %v1734, %v1735
      %v1740 = vsel %vm392, %v1735, %v1734
      %v1741 = vld [vmem:[%s5] sm:$0xff]
      %v1742 = vld [vmem:[%s5 + $0x8] sm:$0xff]
      %v1743 = vld [vmem:[%s5 + $0x10] sm:$0xff]
      %v1744 = vld [vmem:[%s5 + $0x18] sm:$0xff]
      %v1745 = vld [vmem:[%s5 + $0x20] sm:$0xff]
      %v1746 = vld [vmem:[%s5 + $0x28] sm:$0xff]
      %v1747 = vld [vmem:[%s5 + $0x30] sm:$0xff]
      %v1748 = vld [vmem:[%s5 + $0x38] sm:$0xff]
      %v1749 = vld [vmem:[%s5 + $0x40] sm:$0xff]
      %v1750 = vld [vmem:[%s5 + $0x48] sm:$0xff]
      %v1751 = vld [vmem:[%s5 + $0x50] sm:$0xff]
      %v1752 = vld [vmem:[%s5 + $0x58] sm:$0xff]
      %v1753 = vld [vmem:[%s5 + $0x60] sm:$0xff]
      %v1754 = vld [vmem:[%s5 + $0x68] sm:$0xff]
      %v1755 = vld [vmem:[%s5 + $0x70] sm:$0xff]
      %v1756 = vld [vmem:[%s5 + $0x78] sm:$0xff]
      %v1757 = vld [vmem:[%s5 + $0x80] sm:$0xff]
      %v1758 = vld [vmem:[%s5 + $0x88] sm:$0xff]
      %v1759 = vld [vmem:[%s5 + $0x90] sm:$0xff]
      %v1760 = vld [vmem:[%s5 + $0x98] sm:$0xff]
      %v1761 = vld [vmem:[%s5 + $0xa0] sm:$0xff]
      %v1762 = vld [vmem:[%s5 + $0xa8] sm:$0xff]
      %v1763 = vld [vmem:[%s5 + $0xb0] sm:$0xff]
      %v1764 = vld [vmem:[%s5 + $0xb8] sm:$0xff]
      %v1765 = vld [vmem:[%s5 + $0xc0] sm:$0xff]
      %v1766 = vld [vmem:[%s5 + $0xc8] sm:$0xff]
      %v1767 = vld [vmem:[%s5 + $0xd0] sm:$0xff]
      %v1768 = vld [vmem:[%s5 + $0xd8] sm:$0xff]
      %v1769 = vld [vmem:[%s5 + $0xe0] sm:$0xff]
      %v1770 = vld [vmem:[%s5 + $0xe8] sm:$0xff]
      %v1771 = vld [vmem:[%s5 + $0xf0] sm:$0xff]
      %v1772 = vld [vmem:[%s5 + $0xf8] sm:$0xff]
      %v1773 = vld [vmem:[%s5 + $0x100] sm:$0xff]
      %v1774 = vld [vmem:[%s5 + $0x108] sm:$0xff]
      %v1775 = vld [vmem:[%s5 + $0x110] sm:$0xff]
      %v1776 = vld [vmem:[%s5 + $0x118] sm:$0xff]
      %v1777 = vld [vmem:[%s5 + $0x120] sm:$0xff]
      %v1778 = vld [vmem:[%s5 + $0x128] sm:$0xff]
      %v1779 = vld [vmem:[%s5 + $0x130] sm:$0xff]
      %v1780 = vld [vmem:[%s5 + $0x138] sm:$0xff]
      %v1781 = vld [vmem:[%s5 + $0x140] sm:$0xff]
      %v1782 = vld [vmem:[%s5 + $0x148] sm:$0xff]
      %v1783 = vld [vmem:[%s5 + $0x150] sm:$0xff]
      %v1784 = vld [vmem:[%s5 + $0x158] sm:$0xff]
      %v1785 = vld [vmem:[%s5 + $0x160] sm:$0xff]
      %v1786 = vld [vmem:[%s5 + $0x168] sm:$0xff]
      %v1787 = vld [vmem:[%s5 + $0x170] sm:$0xff]
      %v1788 = vld [vmem:[%s5 + $0x178] sm:$0xff]
      %v1789 = vld [vmem:[%s5 + $0x180] sm:$0xff]
      %v1790 = vld [vmem:[%s5 + $0x188] sm:$0xff]
      %v1791 = vld [vmem:[%s5 + $0x190] sm:$0xff]
      %v1792 = vld [vmem:[%s5 + $0x198] sm:$0xff]
      %v1793 = vld [vmem:[%s5 + $0x1a0] sm:$0xff]
      %v1794 = vld [vmem:[%s5 + $0x1a8] sm:$0xff]
      %v1795 = vld [vmem:[%s5 + $0x1b0] sm:$0xff]
      %v1796 = vld [vmem:[%s5 + $0x1b8] sm:$0xff]
      %v1797 = vld [vmem:[%s5 + $0x1c0] sm:$0xff]
      %v1798 = vld [vmem:[%s5 + $0x1c8] sm:$0xff]
      %v1799 = vld [vmem:[%s5 + $0x1d0] sm:$0xff]
      %v1800 = vld [vmem:[%s5 + $0x1d8] sm:$0xff]
      %v1801 = vld [vmem:[%s5 + $0x1e0] sm:$0xff]
      %v1802 = vld [vmem:[%s5 + $0x1e8] sm:$0xff]
      %v1803 = vld [vmem:[%s5 + $0x1f0] sm:$0xff]
      %v1804 = vld [vmem:[%s5 + $0x1f8] sm:$0xff]
      %v1805 = vld [vmem:[%s6] sm:$0x1]
      %v1807 = vlaneseq
      %v1808 = vshrl.u32 %v1807, 7
      %v1809 = vsub.s32 0, %v1808
      %v1810 = vrot.slane %v1805, %v1809
      %1812 = vmatprep.subr.mxu0 0.0
      %1813 = vmatpush1.msra.mxu0 %v1741
      %1814 = vmatprep.subr.mxu0 0.0
      %1815 = vmatpush1.msra.mxu0 %v1742
      %1816 = vmatprep.subr.mxu0 0.0
      %1817 = vmatpush1.msra.mxu0 %v1743
      %1818 = vmatprep.subr.mxu0 0.0
      %1819 = vmatpush1.msra.mxu0 %v1744
      %1820 = vmatprep.subr.mxu0 0.0
      %1821 = vmatpush1.msra.mxu0 %v1745
      %1822 = vmatprep.subr.mxu0 0.0
      %1823 = vmatpush1.msra.mxu0 %v1746
      %1824 = vmatprep.subr.mxu0 0.0
      %1825 = vmatpush1.msra.mxu0 %v1747
      %1826 = vmatprep.subr.mxu0 0.0
      %1827 = vmatpush1.msra.mxu0 %v1748
      %1828 = vmatprep.subr.mxu0 0.0
      %1829 = vmatpush1.msra.mxu0 %v1749
      %1830 = vmatprep.subr.mxu0 0.0
      %1831 = vmatpush1.msra.mxu0 %v1750
      %1832 = vmatprep.subr.mxu0 0.0
      %1833 = vmatpush1.msra.mxu0 %v1751
      %1834 = vmatprep.subr.mxu0 0.0
      %1835 = vmatpush1.msra.mxu0 %v1752
      %1836 = vmatprep.subr.mxu0 0.0
      %1837 = vmatpush1.msra.mxu0 %v1753
      %1838 = vmatprep.subr.mxu0 0.0
      %1839 = vmatpush1.msra.mxu0 %v1754
      %1840 = vmatprep.subr.mxu0 0.0
      %1841 = vmatpush1.msra.mxu0 %v1755
      %1842 = vmatprep.subr.mxu0 0.0
      %1843 = vmatpush1.msra.mxu0 %v1756
      %1844 = vmatprep.subr.mxu0 0.0
      %1845 = vmatpush1.msra.mxu0 %v1757
      %1846 = vmatprep.subr.mxu0 0.0
      %1847 = vmatpush1.msra.mxu0 %v1758
      %1848 = vmatprep.subr.mxu0 0.0
      %1849 = vmatpush1.msra.mxu0 %v1759
      %1850 = vmatprep.subr.mxu0 0.0
      %1851 = vmatpush1.msra.mxu0 %v1760
      %1852 = vmatprep.subr.mxu0 0.0
      %1853 = vmatpush1.msra.mxu0 %v1761
      %1854 = vmatprep.subr.mxu0 0.0
      %1855 = vmatpush1.msra.mxu0 %v1762
      %1856 = vmatprep.subr.mxu0 0.0
      %1857 = vmatpush1.msra.mxu0 %v1763
      %1858 = vmatprep.subr.mxu0 0.0
      %1859 = vmatpush1.msra.mxu0 %v1764
      %1860 = vmatprep.subr.mxu0 0.0
      %1861 = vmatpush1.msra.mxu0 %v1765
      %1862 = vmatprep.subr.mxu0 0.0
      %1863 = vmatpush1.msra.mxu0 %v1766
      %1864 = vmatprep.subr.mxu0 0.0
      %1865 = vmatpush1.msra.mxu0 %v1767
      %1866 = vmatprep.subr.mxu0 0.0
      %1867 = vmatpush1.msra.mxu0 %v1768
      %1868 = vmatprep.subr.mxu0 0.0
      %1869 = vmatpush1.msra.mxu0 %v1769
      %1870 = vmatprep.subr.mxu0 0.0
      %1871 = vmatpush1.msra.mxu0 %v1770
      %1872 = vmatprep.subr.mxu0 0.0
      %1873 = vmatpush1.msra.mxu0 %v1771
      %1874 = vmatprep.subr.mxu0 0.0
      %1875 = vmatpush1.msra.mxu0 %v1772
      %1876 = vmatprep.mubr.f32.mxu0 %v1736
      %1877 = vmatmul.mubr.f32.gmra.mrb[0].mxu0 %v1730
      %v1878 = vpop.f32.mrb[0].mxu0
      %v1879 = vadd.f32 %v1810, %v1878
      %v1880 = vpop.f32.mrb[0].mxu0
      %1881 = vmatprep.mubr.f32.mxu0 %v1740
      %1882 = vmatmul.mubr.f32.gmra.mrb[0].mxu0 %v1731
      %v1883 = vpop.f32.mrb[0].mxu0
      %v1884 = vadd.f32 %v1810, %v1883
      %v1885 = vpop.f32.mrb[0].mxu0
      %1886 = vdwg.mxu0
      %1887 = vmatprep.subr.mxu0 0.0
      %1888 = vmatpush1.msra.mxu0 %v1773
      %1889 = vmatprep.subr.mxu0 0.0
      %1890 = vmatpush1.msra.mxu0 %v1774
      %1891 = vmatprep.subr.mxu0 0.0
      %1892 = vmatpush1.msra.mxu0 %v1775
      %1893 = vmatprep.subr.mxu0 0.0
      %1894 = vmatpush1.msra.mxu0 %v1776
      %1895 = vmatprep.subr.mxu0 0.0
      %1896 = vmatpush1.msra.mxu0 %v1777
      %1897 = vmatprep.subr.mxu0 0.0
      %1898 = vmatpush1.msra.mxu0 %v1778
      %1899 = vmatprep.subr.mxu0 0.0
      %1900 = vmatpush1.msra.mxu0 %v1779
      %1901 = vmatprep.subr.mxu0 0.0
      %1902 = vmatpush1.msra.mxu0 %v1780
      %1903 = vmatprep.subr.mxu0 0.0
      %1904 = vmatpush1.msra.mxu0 %v1781
      %1905 = vmatprep.subr.mxu0 0.0
      %1906 = vmatpush1.msra.mxu0 %v1782
      %1907 = vmatprep.subr.mxu0 0.0
      %1908 = vmatpush1.msra.mxu0 %v1783
      %1909 = vmatprep.subr.mxu0 0.0
      %1910 = vmatpush1.msra.mxu0 %v1784
      %1911 = vmatprep.subr.mxu0 0.0
      %1912 = vmatpush1.msra.mxu0 %v1785
      %1913 = vmatprep.subr.mxu0 0.0
      %1914 = vmatpush1.msra.mxu0 %v1786
      %1915 = vmatprep.subr.mxu0 0.0
      %1916 = vmatpush1.msra.mxu0 %v1787
      %1917 = vmatprep.subr.mxu0 0.0
      %1918 = vmatpush1.msra.mxu0 %v1788
      %1919 = vmatprep.subr.mxu0 0.0
      %1920 = vmatpush1.msra.mxu0 %v1789
      %1921 = vmatprep.subr.mxu0 0.0
      %1922 = vmatpush1.msra.mxu0 %v1790
      %1923 = vmatprep.subr.mxu0 0.0
      %1924 = vmatpush1.msra.mxu0 %v1791
      %1925 = vmatprep.subr.mxu0 0.0
      %1926 = vmatpush1.msra.mxu0 %v1792
      %1927 = vmatprep.subr.mxu0 0.0
      %1928 = vmatpush1.msra.mxu0 %v1793
      %1929 = vmatprep.subr.mxu0 0.0
      %1930 = vmatpush1.msra.mxu0 %v1794
      %1931 = vmatprep.subr.mxu0 0.0
      %1932 = vmatpush1.msra.mxu0 %v1795
      %1933 = vmatprep.subr.mxu0 0.0
      %1934 = vmatpush1.msra.mxu0 %v1796
      %1935 = vmatprep.subr.mxu0 0.0
      %1936 = vmatpush1.msra.mxu0 %v1797
      %1937 = vmatprep.subr.mxu0 0.0
      %1938 = vmatpush1.msra.mxu0 %v1798
      %1939 = vmatprep.subr.mxu0 0.0
      %1940 = vmatpush1.msra.mxu0 %v1799
      %1941 = vmatprep.subr.mxu0 0.0
      %1942 = vmatpush1.msra.mxu0 %v1800
      %1943 = vmatprep.subr.mxu0 0.0
      %1944 = vmatpush1.msra.mxu0 %v1801
      %1945 = vmatprep.subr.mxu0 0.0
      %1946 = vmatpush1.msra.mxu0 %v1802
      %1947 = vmatprep.subr.mxu0 0.0
      %1948 = vmatpush1.msra.mxu0 %v1803
      %1949 = vmatprep.subr.mxu0 0.0
      %1950 = vmatpush1.msra.mxu0 %v1804
      %1951 = vmatprep.mubr.f32.mxu0 %v1740
      %1952 = vmatmul.mubr.f32.gmra.mrb[0].mxu0 %v1731
      %v1953 = vpop.f32.mrb[0].mxu0
      %v1954 = vadd.f32 %v1879, %v1953
      %v1955 = vpop.f32.mrb[0].mxu0
      %1956 = vmatprep.mubr.f32.mxu0 %v1736
      %1957 = vmatmul.mubr.f32.gmra.mrb[0].mxu0 %v1730
      %v1958 = vpop.f32.mrb[0].mxu0
      %v1959 = vadd.f32 %v1884, %v1958
      %v1960 = vpop.f32.mrb[0].mxu0
      %1961 = vdwg.mxu0
      %v1962 = vmax.f32 %v1954, 0.0
      %v1963 = vmax.f32 %v1959, 0.0
      %v1964 = vld [vmem:[%s7] sm:$0xff]
      %v1965 = vld [vmem:[%s7 + $0x8] sm:$0xff]
      %v1966 = vld [vmem:[%s7 + $0x10] sm:$0xff]
      %v1967 = vld [vmem:[%s7 + $0x18] sm:$0xff]
      %v1968 = vld [vmem:[%s7 + $0x20] sm:$0xff]
      %v1969 = vld [vmem:[%s7 + $0x28] sm:$0xff]
      %v1970 = vld [vmem:[%s7 + $0x30] sm:$0xff]
      %v1971 = vld [vmem:[%s7 + $0x38] sm:$0xff]
      %v1972 = vld [vmem:[%s7 + $0x40] sm:$0xff]
      %v1973 = vld [vmem:[%s7 + $0x48] sm:$0xff]
      %v1974 = vld [vmem:[%s7 + $0x50] sm:$0xff]
      %v1975 = vld [vmem:[%s7 + $0x58] sm:$0xff]
      %v1976 = vld [vmem:[%s7 + $0x60] sm:$0xf]
      %v1977 = vld [vmem:[%s8] sm:$0x1]
      %v1979 = vlaneseq
      %v1980 = vshrl.u32 %v1979, 7
      %v1981 = vsub.s32 0, %v1980
      %v1982 = vrot.slane %v1977, %v1981
      %vm1984 = vcmask 818176
      %v1986 = vsel %vm1984, %v1962, 0
      %v1989 = vsel %vm1984, %v1963, 0
      %v1992 = vsel %vm392, %v1976, 0
      %1994 = vmatprep.subr.mxu0 0.0
      %1995 = vmatpush1.msra.mxu0 %v1964
      %1996 = vmatprep.subr.mxu0 0.0
      %1997 = vmatpush1.msra.mxu0 %v1965
      %1998 = vmatprep.subr.mxu0 0.0
      %1999 = vmatpush1.msra.mxu0 %v1966
      %2000 = vmatprep.subr.mxu0 0.0
      %2001 = vmatpush1.msra.mxu0 %v1967
      %2002 = vmatprep.subr.mxu0 0.0
      %2003 = vmatpush1.msra.mxu0 %v1968
      %2004 = vmatprep.subr.mxu0 0.0
      %2005 = vmatpush1.msra.mxu0 %v1969
      %2006 = vmatprep.subr.mxu0 0.0
      %2007 = vmatpush1.msra.mxu0 %v1970
      %2008 = vmatprep.subr.mxu0 0.0
      %2009 = vmatpush1.msra.mxu0 %v1971
      %2010 = vmatprep.subr.mxu0 0.0
      %2011 = vmatpush1.msra.mxu0 %v1972
      %2012 = vmatprep.subr.mxu0 0.0
      %2013 = vmatpush1.msra.mxu0 %v1973
      %2014 = vmatprep.subr.mxu0 0.0
      %2015 = vmatpush1.msra.mxu0 %v1974
      %2016 = vmatprep.subr.mxu0 0.0
      %2017 = vmatpush1.msra.mxu0 %v1975
      %2018 = vmatprep.subr.mxu0 0.0
      %2019 = vmatpush1.msra.mxu0 %v1992
      %2020 = vmatprep.subr.mxu0 0.0
      %2021 = vmatpush1.msra.mxu0 0.0
      %2022 = vmatprep.subr.mxu0 0.0
      %2023 = vmatpush1.msra.mxu0 0.0
      %2024 = vmatprep.subr.mxu0 0.0
      %2025 = vmatpush1.msra.mxu0 0.0
      %2026 = vmatprep.subr.mxu0 0.0
      %2027 = vmatpush1.msra.mxu0 0.0
      %2028 = vmatprep.subr.mxu0 0.0
      %2029 = vmatpush1.msra.mxu0 0.0
      %2030 = vmatprep.subr.mxu0 0.0
      %2031 = vmatpush1.msra.mxu0 0.0
      %2032 = vmatprep.subr.mxu0 0.0
      %2033 = vmatpush1.msra.mxu0 0.0
      %2034 = vmatprep.subr.mxu0 0.0
      %2035 = vmatpush1.msra.mxu0 0.0
      %2036 = vmatprep.subr.mxu0 0.0
      %2037 = vmatpush1.msra.mxu0 0.0
      %2038 = vmatprep.subr.mxu0 0.0
      %2039 = vmatpush1.msra.mxu0 0.0
      %2040 = vmatprep.subr.mxu0 0.0
      %2041 = vmatpush1.msra.mxu0 0.0
      %2042 = vmatprep.subr.mxu0 0.0
      %2043 = vmatpush1.msra.mxu0 0.0
      %2044 = vmatprep.subr.mxu0 0.0
      %2045 = vmatpush1.msra.mxu0 0.0
      %2046 = vmatprep.subr.mxu0 0.0
      %2047 = vmatpush1.msra.mxu0 0.0
      %2048 = vmatprep.subr.mxu0 0.0
      %2049 = vmatpush1.msra.mxu0 0.0
      %2050 = vmatprep.subr.mxu0 0.0
      %2051 = vmatpush1.msra.mxu0 0.0
      %2052 = vmatprep.subr.mxu0 0.0
      %2053 = vmatpush1.msra.mxu0 0.0
      %2054 = vmatprep.subr.mxu0 0.0
      %2055 = vmatpush1.msra.mxu0 0.0
      %2056 = vmatprep.subr.mxu0 0.0
      %2057 = vmatpush1.msra.mxu0 0.0
      %2058 = vmatprep.mubr.f32.mxu0 0.0
      %2059 = vmatmul.mubr.f32.gmra.mrb[0].mxu0 %v1986
      %v2060 = vpop.f32.mrb[0].mxu0
      %v2061 = vadd.f32 %v1982, %v2060
      %v2062 = vpop.f32.mrb[0].mxu0
      %2063 = vmatprep.mubr.f32.mxu0 0.0
      %2064 = vmatmul.mubr.f32.gmra.mrb[0].mxu0 %v1989
      %v2065 = vpop.f32.mrb[0].mxu0
      %v2066 = vadd.f32 %v1982, %v2065
      %v2067 = vpop.f32.mrb[0].mxu0
      %2068 = vdwg.mxu0
      %vm2069 = vcmask 80896
      %2070 = vst.msk [vmem:[%s332] sm:$0xff] %vm2069, %v2061
      %2071 = vst.msk [vmem:[%s332 + $0x8] sm:$0xff] %vm2069, %v2066
      %p2072 = scmp.lt.s32.totalorder %s20, 1
      %s2073 = scalar_select %p2072, %s20, 1
      %s2074 = smul.addr %s2073, 2
      %s2075 = smul.addr %s2074, 8
      %s2076 = scalar_lea.vmem %s9, %s2075
      // Predicated region
      $region57: #{minionn_forward.1} parent=55 // pred_check
        %p2077 = pneg %p232
      $region58: #{minionn_forward.1} parent=55 // pred_check_branch
        %2079 = sbr.rel (%p2077) target = $region60
      $region59: #{minionn_forward.1} parent=55 // pred_region
        _
      $region60: #{minionn_forward.1} parent=55 // pred_fallthru
        _
    $region56: #{minionn_forward.1} parent=5 // pred_fallthru
      _
    %p2080 = scmp.le.s32.totalorder 2, %s15
    // Predicated region
    $region61: #{minionn_forward.1} parent=5 // pred_check
      %p2081 = pneg %p2080
    $region62: #{minionn_forward.1} parent=5 // pred_check_branch
      %2083 = sbr.rel (%p2081) target = $region64
    $region63: #{minionn_forward.1} parent=5 // pred_region
      %s2084 = ssub.s32 %s15, 2
      // Predicated region
      $region65: #{minionn_forward.1} parent=63 // pred_check
        %p2085 = pneg %p238
      $region66: #{minionn_forward.1} parent=63 // pred_check_branch
        %2087 = sbr.rel (%p2085) target = $region68
      $region67: #{minionn_forward.1} parent=63 // pred_region
        %p2088 = scmp.lt.s32.totalorder %s21, 1
        %s2089 = scalar_select %p2088, %s21, 1
        %s2090 = smul.addr %s2089, 2
        %s2091 = smul.addr %s2090, 8
        %s2092 = scalar_lea.vmem %s9, %s2091
      $region68: #{minionn_forward.1} parent=63 // pred_fallthru
        _
    $region64: #{minionn_forward.1} parent=5 // pred_fallthru
      _
  $region6: #{minionn_forward.1} parent=0 // loop_footer
    %s19 = sadd.s32 1, %s15
  $region7: #{minionn_forward.1} parent=0 // loop_footer_branch
    %14 = sbr.rel target = $region3
  $region8: #{minionn_forward.1} parent=0 // loop_exit
    _

</llo_original>
